<compile_context>
chip_gen: v5e
topology: v5e:2x2
jax: 0.10.0
libtpu: 0.0.40
codegen_flags: <defaults>
</compile_context>

<pallas_src>
import jax
import jax.numpy as jnp
from jax import lax
from jax.experimental import pallas as pl
from jax.experimental.pallas import tpu as pltpu
import numpy as np


def rnn_attn_kernel(x_ref, wih_ref, whh_ref, b_ref, wl_ref, bl_ref,
                    out_ref, hs_ref):
    """x_ref: (S,Bt,E) bf16 | wih: (E,Hp) bf16 | whh: (Hp,Hp) bf16 | b: (1,Hp) f32
    wl: (Hp,Op) bf16 | bl: (1,Op) f32 | out_ref: (Bt,Op) f32
    hs_ref scratch: (S,Bt,Hp) bf16 -- holds xp_t+b, overwritten in place by h_t."""
    S, Bt, E = x_ref.shape
    Hp = whh_ref.shape[0]

    # capped unroll (largest divisor of S that is <= 8) -- full unroll over long
    # S explodes instruction count / scheduler pressure.
    unroll = next(u for u in (8, 4, 2, 1) if S % u == 0)

    # hoisted loads (kept out of every loop)
    w_ih = wih_ref[...]
    w_hh = whh_ref[...]
    bias = b_ref[...]                                     # (1, Hp) f32

    # --- input projection, hoisted off the serial critical path: independent
    # (Bt,E)@(E,Hp) bf16 matmuls per step (pipelined by the unroll), staged in
    # the bf16 hs scratch and overwritten by h_t below.
    # TODO(synk): for very long S, stream x over S via memory_space=pl.ANY +
    # pltpu.emit_pipeline instead of holding the whole (S,Bt,E) block.
    def proj_step(t, carry):
        xp = jnp.dot(x_ref[t], w_ih, preferred_element_type=jnp.float32) + bias
        hs_ref[t] = xp.astype(hs_ref.dtype)
        return carry

    lax.fori_loop(0, S, proj_step, 0, unroll=unroll)

    # --- recurrence: h carried in vregs (f32 accumulation), exactly one bf16
    # MXU push per step.
    # TODO(synk): on v5e/v6e, keep W_hh resident across steps via
    # pltpu.matmul_push_rhs / matmul_acc_lhs / matmul_pop.
    def step(t, h_prev):
        pre = (hs_ref[t].astype(jnp.float32)
               + jnp.dot(h_prev.astype(jnp.bfloat16), w_hh,
                         preferred_element_type=jnp.float32))
        h_new = jnp.tanh(pre)
        hs_ref[t] = h_new.astype(hs_ref.dtype)            # per-step output
        return h_new

    h_final = lax.fori_loop(0, S, step, jnp.zeros((Bt, Hp), jnp.float32),
                            unroll=unroll)

    # --- attention: scores[s,b] = <h_s, h_final>, softmax over s, weighted sum.
    # Streaming online-softmax pass over S: never materializes (S,Bt,Hp).
    def attn_step(t, carry):
        m_p, l_p, acc_p = carry
        o_t = hs_ref[t].astype(jnp.float32)                       # (Bt, Hp)
        s_t = jnp.sum(o_t * h_final, axis=-1, keepdims=True)      # (Bt, 1)
        m_n = jnp.maximum(m_p, s_t)
        a = jnp.exp(m_p - m_n)
        p = jnp.exp(s_t - m_n)
        return m_n, a * l_p + p, a * acc_p + p * o_t

    m0 = jnp.full((Bt, 1), -jnp.inf, jnp.float32)
    l0 = jnp.zeros((Bt, 1), jnp.float32)
    acc0 = jnp.zeros((Bt, Hp), jnp.float32)
    _, l_f, acc_f = lax.fori_loop(0, S, attn_step, (m0, l0, acc0),
                                  unroll=unroll)
    new_h = acc_f * pl.reciprocal(l_f, approx=True)               # (Bt, Hp)

    # --- label linear; (Bt, Op) lane-dense output block -> unmasked store.
    out_ref[...] = (jnp.dot(new_h.astype(jnp.bfloat16), wl_ref[...],
                            preferred_element_type=jnp.float32)
                    + bl_ref[...]).astype(out_ref.dtype)


def _pad_to(a, target_shape):
    pads = [(0, t - s) for s, t in zip(a.shape, target_shape)]
    return jnp.pad(a, pads)


def rnn_attention_forward(x_emb, w_ih, w_hh, bias, w_label, b_label,
                          *, batch_tile=128):
    """x_emb: (S, B, E) time-major activations (f32). Returns logits (B, O) f32."""
    S, B, E = x_emb.shape
    H = w_hh.shape[0]
    O = w_label.shape[1]

    def rup(x, m):
        return (x + m - 1) // m * m

    Hp = rup(H, 128)         # lane-dense hidden dim
    Op = rup(O, 128)         # lane-dense output dim -> unmasked logits store

    # batch tiling: multiple of 16 (bf16 sublane packing); prefer >=2 tiles so
    # dimension_semantics=("parallel",) can shard across v7x's two TensorCores.
    B_al = rup(B, 16)
    bt = min(rup(batch_tile, 16), B_al)
    if bt < B_al < 2 * bt:
        bt = rup((B_al + 1) // 2, 16)
    Bp = rup(B_al, bt)
    grid = (Bp // bt,)

    # bf16 MXU operands (f32 accumulation in-kernel); x keeps its full unpadded
    # E as the last block dim (full-dim exception) so the streamed input isn't
    # inflated. Zero-padded H/O columns stay exactly zero through tanh; padded
    # batch rows are sliced off after the call.
    x_p = _pad_to(x_emb.astype(jnp.bfloat16), (S, Bp, E))
    wih_p = _pad_to(w_ih.astype(jnp.bfloat16), (E, Hp))
    whh_p = _pad_to(w_hh.astype(jnp.bfloat16), (Hp, Hp))
    b_p = _pad_to(bias.astype(jnp.float32), (1, Hp))
    wl_p = _pad_to(w_label.astype(jnp.bfloat16), (Hp, Op))
    bl_p = _pad_to(b_label.astype(jnp.float32), (1, Op))

    # generation-aware VMEM budget (v7x: 64 MiB physical; v5e/v6e: 128 MiB)
    try:
        vmem_cap = pltpu.get_tpu_info().vmem_capacity_bytes
    except Exception:  # interpret mode / older API -> assume the tightest gen
        vmem_cap = 64 * 2**20
    vmem_need = (S * bt * Hp * 2                                    # hs scratch (bf16)
                 + 2 * S * bt * E * 2                               # x block (2x buf, bf16)
                 + 2 * ((E * Hp + Hp * Hp + Hp * Op) * 2            # weights (bf16, 2x buf)
                        + (Hp + Op) * 4)                            # biases (f32, 2x buf)
                 + 2 * bt * Op * 4)                                 # out block (2x buf)
    vmem_limit = int(max(16 * 2**20,
                         min(vmem_cap - 12 * 2**20,
                             max(32 * 2**20, 2 * vmem_need))))

    # NOTE: the weight/bias blocks are grid-invariant; their footprint is already
    # halved by bf16 (single-buffering them via pipeline_mode=pl.Buffered(1) is a
    # further v7x-only VMEM option).
    out = pl.pallas_call(
        rnn_attn_kernel,
        out_shape=jax.ShapeDtypeStruct((Bp, Op), jnp.float32),
        grid_spec=pltpu.PrefetchScalarGridSpec(
            num_scalar_prefetch=0,
            grid=grid,
            in_specs=[
                pl.BlockSpec((S, bt, E), lambda i: (0, i, 0)),    # x (batch-tiled)
                pl.BlockSpec((E, Hp), lambda i: (0, 0)),          # W_ih
                pl.BlockSpec((Hp, Hp), lambda i: (0, 0)),         # W_hh
                pl.BlockSpec((1, Hp), lambda i: (0, 0)),          # bias
                pl.BlockSpec((Hp, Op), lambda i: (0, 0)),         # W_label
                pl.BlockSpec((1, Op), lambda i: (0, 0)),          # b_label
            ],
            out_specs=pl.BlockSpec((bt, Op), lambda i: (i, 0)),
            scratch_shapes=[pltpu.VMEM((S, bt, Hp), jnp.bfloat16)],
        ),
        compiler_params=pltpu.CompilerParams(
            dimension_semantics=("parallel",),     # batch tiles are independent
            vmem_limit_bytes=vmem_limit,
        ),
    )(x_p, wih_p, whh_p, b_p, wl_p, bl_p)

    return out[:B, :O]


def reference_forward(x_emb, w_ih, w_hh, bias, w_label, b_label):
    """Pure-JAX f32 reference mirroring the PyTorch forward pass."""
    S, B, _ = x_emb.shape
    H = w_hh.shape[0]

    def scan_step(h, x_t):
        h_new = jnp.tanh(x_t @ w_ih + h @ w_hh + bias)
        return h_new, h_new

    h0 = jnp.zeros((B, H), jnp.float32)
    h_final, outs = lax.scan(scan_step, h0, x_emb)            # outs: (S, B, H)
    outs_bsh = jnp.transpose(outs, (1, 0, 2))                 # (B, S, H)
    scores = jnp.einsum("bsh,bh->bs", outs_bsh, h_final)      # (B, S)
    attn = jax.nn.softmax(scores, axis=1)
    new_h = jnp.einsum("bsh,bs->bh", outs_bsh, attn)          # (B, H)
    return new_h @ w_label + b_label


if __name__ == "__main__":
    # small shapes consistent with the module's forward pass
    batch_size = 2
    seq_len = 8
    vocab_size = 16
    embedding_length = 32
    hidden_size = 32
    output_size = 4

    key = jax.random.PRNGKey(0)
    k_emb, k_ih, k_hh, k_b, k_wl, k_bl, k_ids = jax.random.split(key, 7)

    # deterministic synthetic parameters (shapes from __init__)
    emb_table = jax.random.normal(k_emb, (vocab_size, embedding_length), jnp.float32) * 0.1
    w_ih = jax.random.normal(k_ih, (embedding_length, hidden_size), jnp.float32) * 0.1
    w_hh = jax.random.normal(k_hh, (hidden_size, hidden_size), jnp.float32) * 0.1
    bias = jax.random.normal(k_b, (1, hidden_size), jnp.float32) * 0.1      # b_ih + b_hh
    w_label = jax.random.normal(k_wl, (hidden_size, output_size), jnp.float32) * 0.1
    b_label = jax.random.normal(k_bl, (1, output_size), jnp.float32) * 0.1

    # input token ids (B, S); embedding gather done directly in time-major
    # (S, B, E) order so no activation transpose/HBM round trip before the kernel.
    # TODO(synk): in-kernel gather via PrefetchScalarGridSpec row gather if the
    # embedding lookup ever becomes the bottleneck.
    input_ids = jax.random.randint(k_ids, (batch_size, seq_len), 0, vocab_size)
    x_emb = emb_table[input_ids.T]                             # (S, B, E) time-major

    logits = rnn_attention_forward(x_emb, w_ih, w_hh, bias, w_label, b_label)
    jax.block_until_ready(logits)

    ref = reference_forward(x_emb, w_ih, w_hh, bias, w_label, b_label)
    # bf16 MXU operands + bf16 hs scratch -> relax tolerance vs the f32 reference
    np.testing.assert_allclose(np.asarray(logits), np.asarray(ref),
                               rtol=2e-2, atol=5e-3)

    print("KERNEL_OK")
</pallas_src>

<mosaic_0001>
module attributes {stable_mosaic.version = 11 : i64} {
  func.func @rnn_attn_kernel(%arg0: i32, %arg1: memref<8x16x32xbf16, #tpu.memory_space<vmem>>, %arg2: memref<32x128xbf16, #tpu.memory_space<vmem>>, %arg3: memref<128x128xbf16, #tpu.memory_space<vmem>>, %arg4: memref<1x128xf32, #tpu.memory_space<vmem>>, %arg5: memref<128x128xbf16, #tpu.memory_space<vmem>>, %arg6: memref<1x128xf32, #tpu.memory_space<vmem>>, %arg7: memref<16x128xf32, #tpu.memory_space<vmem>>, %arg8: memref<8x16x128xbf16, #tpu.memory_space<vmem>>) attributes {dimension_semantics = [#tpu.dimension_semantics<parallel>], iteration_bounds = array<i64: 1>, scalar_prefetch = 0 : i64, scratch_operands = 1 : i64, tpu.core_type = #tpu.core_type<tc>, window_params = [{transform_indices = @transform_0, window_bounds = array<i64: 8, 16, 32>}, {pipeline_mode = #tpu.pipeline_mode<synchronous>, transform_indices = @transform_1, window_bounds = array<i64: 32, 128>}, {pipeline_mode = #tpu.pipeline_mode<synchronous>, transform_indices = @transform_2, window_bounds = array<i64: 128, 128>}, {pipeline_mode = #tpu.pipeline_mode<synchronous>, transform_indices = @transform_3, window_bounds = array<i64: 1, 128>}, {pipeline_mode = #tpu.pipeline_mode<synchronous>, transform_indices = @transform_4, window_bounds = array<i64: 128, 128>}, {pipeline_mode = #tpu.pipeline_mode<synchronous>, transform_indices = @transform_5, window_bounds = array<i64: 1, 128>}, {transform_indices = @transform_6, window_bounds = array<i64: 16, 128>}]} {
    %c0 = arith.constant 0 : index
    %c0_0 = arith.constant 0 : index
    %0 = vector.load %arg2[%c0, %c0_0] : memref<32x128xbf16, #tpu.memory_space<vmem>>, vector<32x128xbf16>
    %c0_1 = arith.constant 0 : index
    %c0_2 = arith.constant 0 : index
    %1 = vector.load %arg3[%c0_1, %c0_2] : memref<128x128xbf16, #tpu.memory_space<vmem>>, vector<128x128xbf16>
    %c0_3 = arith.constant 0 : index
    %c0_4 = arith.constant 0 : index
    %2 = vector.load %arg4[%c0_3, %c0_4] : memref<1x128xf32, #tpu.memory_space<vmem>>, vector<1x128xf32>
    %c0_i32 = arith.constant 0 : i32
    %3 = arith.index_cast %c0_i32 : i32 to index
    %c0_5 = arith.constant 0 : index
    %c0_6 = arith.constant 0 : index
    %4 = vector.load %arg1[%3, %c0_5, %c0_6] : memref<8x16x32xbf16, #tpu.memory_space<vmem>>, vector<1x16x32xbf16>
    %5 = vector.shape_cast %4 : vector<1x16x32xbf16> to vector<16x32xbf16>
    %cst = arith.constant dense<0.000000e+00> : vector<16x128xf32>
    %6 = tpu.matmul %5, %0, %cst {dimension_numbers = #tpu.dot_dimension_numbers<[1], [0], [0], [1], [0, 0, 1, 1], [], []>} : vector<16x32xbf16>, vector<32x128xbf16>, vector<16x128xf32> -> vector<16x128xf32>
    %7 = vector.broadcast %2 : vector<1x128xf32> to vector<16x128xf32>
    %8 = arith.addf %6, %7 : vector<16x128xf32>
    %9 = arith.truncf %8 : vector<16x128xf32> to vector<16x128xbf16>
    %10 = arith.index_cast %c0_i32 : i32 to index
    %c0_7 = arith.constant 0 : index
    %c0_8 = arith.constant 0 : index
    %11 = vector.load %arg8[%10, %c0_7, %c0_8] : memref<8x16x128xbf16, #tpu.memory_space<vmem>>, vector<1x16x128xbf16>
    %12 = vector.shape_cast %11 : vector<1x16x128xbf16> to vector<16x128xbf16>
    %13 = vector.shape_cast %9 : vector<16x128xbf16> to vector<1x16x128xbf16>
    tpu.vector_store %arg8[%10, %c0_7, %c0_8], %13 {strides = array<i32>} : memref<8x16x128xbf16, #tpu.memory_space<vmem>>, vector<1x16x128xbf16>,
    %c1_i32 = arith.constant 1 : i32
    %14 = arith.index_cast %c1_i32 : i32 to index
    %c0_9 = arith.constant 0 : index
    %c0_10 = arith.constant 0 : index
    %15 = vector.load %arg1[%14, %c0_9, %c0_10] : memref<8x16x32xbf16, #tpu.memory_space<vmem>>, vector<1x16x32xbf16>
    %16 = vector.shape_cast %15 : vector<1x16x32xbf16> to vector<16x32xbf16>
    %cst_11 = arith.constant dense<0.000000e+00> : vector<16x128xf32>
    %17 = tpu.matmul %16, %0, %cst_11 {dimension_numbers = #tpu.dot_dimension_numbers<[1], [0], [0], [1], [0, 0, 1, 1], [], []>} : vector<16x32xbf16>, vector<32x128xbf16>, vector<16x128xf32> -> vector<16x128xf32>
    %18 = vector.broadcast %2 : vector<1x128xf32> to vector<16x128xf32>
    %19 = arith.addf %17, %18 : vector<16x128xf32>
    %20 = arith.truncf %19 : vector<16x128xf32> to vector<16x128xbf16>
    %21 = arith.index_cast %c1_i32 : i32 to index
    %c0_12 = arith.constant 0 : index
    %c0_13 = arith.constant 0 : index
    %22 = vector.load %arg8[%21, %c0_12, %c0_13] : memref<8x16x128xbf16, #tpu.memory_space<vmem>>, vector<1x16x128xbf16>
    %23 = vector.shape_cast %22 : vector<1x16x128xbf16> to vector<16x128xbf16>
    %24 = vector.shape_cast %20 : vector<16x128xbf16> to vector<1x16x128xbf16>
    tpu.vector_store %arg8[%21, %c0_12, %c0_13], %24 {strides = array<i32>} : memref<8x16x128xbf16, #tpu.memory_space<vmem>>, vector<1x16x128xbf16>,
    %c2_i32 = arith.constant 2 : i32
    %25 = arith.index_cast %c2_i32 : i32 to index
    %c0_14 = arith.constant 0 : index
    %c0_15 = arith.constant 0 : index
    %26 = vector.load %arg1[%25, %c0_14, %c0_15] : memref<8x16x32xbf16, #tpu.memory_space<vmem>>, vector<1x16x32xbf16>
    %27 = vector.shape_cast %26 : vector<1x16x32xbf16> to vector<16x32xbf16>
    %cst_16 = arith.constant dense<0.000000e+00> : vector<16x128xf32>
    %28 = tpu.matmul %27, %0, %cst_16 {dimension_numbers = #tpu.dot_dimension_numbers<[1], [0], [0], [1], [0, 0, 1, 1], [], []>} : vector<16x32xbf16>, vector<32x128xbf16>, vector<16x128xf32> -> vector<16x128xf32>
    %29 = vector.broadcast %2 : vector<1x128xf32> to vector<16x128xf32>
    %30 = arith.addf %28, %29 : vector<16x128xf32>
    %31 = arith.truncf %30 : vector<16x128xf32> to vector<16x128xbf16>
    %32 = arith.index_cast %c2_i32 : i32 to index
    %c0_17 = arith.constant 0 : index
    %c0_18 = arith.constant 0 : index
    %33 = vector.load %arg8[%32, %c0_17, %c0_18] : memref<8x16x128xbf16, #tpu.memory_space<vmem>>, vector<1x16x128xbf16>
    %34 = vector.shape_cast %33 : vector<1x16x128xbf16> to vector<16x128xbf16>
    %35 = vector.shape_cast %31 : vector<16x128xbf16> to vector<1x16x128xbf16>
    tpu.vector_store %arg8[%32, %c0_17, %c0_18], %35 {strides = array<i32>} : memref<8x16x128xbf16, #tpu.memory_space<vmem>>, vector<1x16x128xbf16>,
    %c3_i32 = arith.constant 3 : i32
    %36 = arith.index_cast %c3_i32 : i32 to index
    %c0_19 = arith.constant 0 : index
    %c0_20 = arith.constant 0 : index
    %37 = vector.load %arg1[%36, %c0_19, %c0_20] : memref<8x16x32xbf16, #tpu.memory_space<vmem>>, vector<1x16x32xbf16>
    %38 = vector.shape_cast %37 : vector<1x16x32xbf16> to vector<16x32xbf16>
    %cst_21 = arith.constant dense<0.000000e+00> : vector<16x128xf32>
    %39 = tpu.matmul %38, %0, %cst_21 {dimension_numbers = #tpu.dot_dimension_numbers<[1], [0], [0], [1], [0, 0, 1, 1], [], []>} : vector<16x32xbf16>, vector<32x128xbf16>, vector<16x128xf32> -> vector<16x128xf32>
    %40 = vector.broadcast %2 : vector<1x128xf32> to vector<16x128xf32>
    %41 = arith.addf %39, %40 : vector<16x128xf32>
    %42 = arith.truncf %41 : vector<16x128xf32> to vector<16x128xbf16>
    %43 = arith.index_cast %c3_i32 : i32 to index
    %c0_22 = arith.constant 0 : index
    %c0_23 = arith.constant 0 : index
    %44 = vector.load %arg8[%43, %c0_22, %c0_23] : memref<8x16x128xbf16, #tpu.memory_space<vmem>>, vector<1x16x128xbf16>
    %45 = vector.shape_cast %44 : vector<1x16x128xbf16> to vector<16x128xbf16>
    %46 = vector.shape_cast %42 : vector<16x128xbf16> to vector<1x16x128xbf16>
    tpu.vector_store %arg8[%43, %c0_22, %c0_23], %46 {strides = array<i32>} : memref<8x16x128xbf16, #tpu.memory_space<vmem>>, vector<1x16x128xbf16>,
    %c4_i32 = arith.constant 4 : i32
    %47 = arith.index_cast %c4_i32 : i32 to index
    %c0_24 = arith.constant 0 : index
    %c0_25 = arith.constant 0 : index
    %48 = vector.load %arg1[%47, %c0_24, %c0_25] : memref<8x16x32xbf16, #tpu.memory_space<vmem>>, vector<1x16x32xbf16>
    %49 = vector.shape_cast %48 : vector<1x16x32xbf16> to vector<16x32xbf16>
    %cst_26 = arith.constant dense<0.000000e+00> : vector<16x128xf32>
    %50 = tpu.matmul %49, %0, %cst_26 {dimension_numbers = #tpu.dot_dimension_numbers<[1], [0], [0], [1], [0, 0, 1, 1], [], []>} : vector<16x32xbf16>, vector<32x128xbf16>, vector<16x128xf32> -> vector<16x128xf32>
    %51 = vector.broadcast %2 : vector<1x128xf32> to vector<16x128xf32>
    %52 = arith.addf %50, %51 : vector<16x128xf32>
    %53 = arith.truncf %52 : vector<16x128xf32> to vector<16x128xbf16>
    %54 = arith.index_cast %c4_i32 : i32 to index
    %c0_27 = arith.constant 0 : index
    %c0_28 = arith.constant 0 : index
    %55 = vector.load %arg8[%54, %c0_27, %c0_28] : memref<8x16x128xbf16, #tpu.memory_space<vmem>>, vector<1x16x128xbf16>
    %56 = vector.shape_cast %55 : vector<1x16x128xbf16> to vector<16x128xbf16>
    %57 = vector.shape_cast %53 : vector<16x128xbf16> to vector<1x16x128xbf16>
    tpu.vector_store %arg8[%54, %c0_27, %c0_28], %57 {strides = array<i32>} : memref<8x16x128xbf16, #tpu.memory_space<vmem>>, vector<1x16x128xbf16>,
    %c5_i32 = arith.constant 5 : i32
    %58 = arith.index_cast %c5_i32 : i32 to index
    %c0_29 = arith.constant 0 : index
    %c0_30 = arith.constant 0 : index
    %59 = vector.load %arg1[%58, %c0_29, %c0_30] : memref<8x16x32xbf16, #tpu.memory_space<vmem>>, vector<1x16x32xbf16>
    %60 = vector.shape_cast %59 : vector<1x16x32xbf16> to vector<16x32xbf16>
    %cst_31 = arith.constant dense<0.000000e+00> : vector<16x128xf32>
    %61 = tpu.matmul %60, %0, %cst_31 {dimension_numbers = #tpu.dot_dimension_numbers<[1], [0], [0], [1], [0, 0, 1, 1], [], []>} : vector<16x32xbf16>, vector<32x128xbf16>, vector<16x128xf32> -> vector<16x128xf32>
    %62 = vector.broadcast %2 : vector<1x128xf32> to vector<16x128xf32>
    %63 = arith.addf %61, %62 : vector<16x128xf32>
    %64 = arith.truncf %63 : vector<16x128xf32> to vector<16x128xbf16>
    %65 = arith.index_cast %c5_i32 : i32 to index
    %c0_32 = arith.constant 0 : index
    %c0_33 = arith.constant 0 : index
    %66 = vector.load %arg8[%65, %c0_32, %c0_33] : memref<8x16x128xbf16, #tpu.memory_space<vmem>>, vector<1x16x128xbf16>
    %67 = vector.shape_cast %66 : vector<1x16x128xbf16> to vector<16x128xbf16>
    %68 = vector.shape_cast %64 : vector<16x128xbf16> to vector<1x16x128xbf16>
    tpu.vector_store %arg8[%65, %c0_32, %c0_33], %68 {strides = array<i32>} : memref<8x16x128xbf16, #tpu.memory_space<vmem>>, vector<1x16x128xbf16>,
    %c6_i32 = arith.constant 6 : i32
    %69 = arith.index_cast %c6_i32 : i32 to index
    %c0_34 = arith.constant 0 : index
    %c0_35 = arith.constant 0 : index
    %70 = vector.load %arg1[%69, %c0_34, %c0_35] : memref<8x16x32xbf16, #tpu.memory_space<vmem>>, vector<1x16x32xbf16>
    %71 = vector.shape_cast %70 : vector<1x16x32xbf16> to vector<16x32xbf16>
    %cst_36 = arith.constant dense<0.000000e+00> : vector<16x128xf32>
    %72 = tpu.matmul %71, %0, %cst_36 {dimension_numbers = #tpu.dot_dimension_numbers<[1], [0], [0], [1], [0, 0, 1, 1], [], []>} : vector<16x32xbf16>, vector<32x128xbf16>, vector<16x128xf32> -> vector<16x128xf32>
    %73 = vector.broadcast %2 : vector<1x128xf32> to vector<16x128xf32>
    %74 = arith.addf %72, %73 : vector<16x128xf32>
    %75 = arith.truncf %74 : vector<16x128xf32> to vector<16x128xbf16>
    %76 = arith.index_cast %c6_i32 : i32 to index
    %c0_37 = arith.constant 0 : index
    %c0_38 = arith.constant 0 : index
    %77 = vector.load %arg8[%76, %c0_37, %c0_38] : memref<8x16x128xbf16, #tpu.memory_space<vmem>>, vector<1x16x128xbf16>
    %78 = vector.shape_cast %77 : vector<1x16x128xbf16> to vector<16x128xbf16>
    %79 = vector.shape_cast %75 : vector<16x128xbf16> to vector<1x16x128xbf16>
    tpu.vector_store %arg8[%76, %c0_37, %c0_38], %79 {strides = array<i32>} : memref<8x16x128xbf16, #tpu.memory_space<vmem>>, vector<1x16x128xbf16>,
    %c7_i32 = arith.constant 7 : i32
    %80 = arith.index_cast %c7_i32 : i32 to index
    %c0_39 = arith.constant 0 : index
    %c0_40 = arith.constant 0 : index
    %81 = vector.load %arg1[%80, %c0_39, %c0_40] : memref<8x16x32xbf16, #tpu.memory_space<vmem>>, vector<1x16x32xbf16>
    %82 = vector.shape_cast %81 : vector<1x16x32xbf16> to vector<16x32xbf16>
    %cst_41 = arith.constant dense<0.000000e+00> : vector<16x128xf32>
    %83 = tpu.matmul %82, %0, %cst_41 {dimension_numbers = #tpu.dot_dimension_numbers<[1], [0], [0], [1], [0, 0, 1, 1], [], []>} : vector<16x32xbf16>, vector<32x128xbf16>, vector<16x128xf32> -> vector<16x128xf32>
    %84 = vector.broadcast %2 : vector<1x128xf32> to vector<16x128xf32>
    %85 = arith.addf %83, %84 : vector<16x128xf32>
    %86 = arith.truncf %85 : vector<16x128xf32> to vector<16x128xbf16>
    %87 = arith.index_cast %c7_i32 : i32 to index
    %c0_42 = arith.constant 0 : index
    %c0_43 = arith.constant 0 : index
    %88 = vector.load %arg8[%87, %c0_42, %c0_43] : memref<8x16x128xbf16, #tpu.memory_space<vmem>>, vector<1x16x128xbf16>
    %89 = vector.shape_cast %88 : vector<1x16x128xbf16> to vector<16x128xbf16>
    %90 = vector.shape_cast %86 : vector<16x128xbf16> to vector<1x16x128xbf16>
    tpu.vector_store %arg8[%87, %c0_42, %c0_43], %90 {strides = array<i32>} : memref<8x16x128xbf16, #tpu.memory_space<vmem>>, vector<1x16x128xbf16>,
    %c8_i32 = arith.constant 8 : i32
    %cst_44 = arith.constant 0.000000e+00 : f32
    %91 = vector.broadcast %cst_44 : f32 to vector<16x128xf32>
    %c0_i32_45 = arith.constant 0 : i32
    %92 = arith.index_cast %c0_i32_45 : i32 to index
    %c0_46 = arith.constant 0 : index
    %c0_47 = arith.constant 0 : index
    %93 = vector.load %arg8[%92, %c0_46, %c0_47] : memref<8x16x128xbf16, #tpu.memory_space<vmem>>, vector<1x16x128xbf16>
    %94 = vector.shape_cast %93 : vector<1x16x128xbf16> to vector<16x128xbf16>
    %95 = arith.extf %94 : vector<16x128xbf16> to vector<16x128xf32>
    %96 = arith.truncf %91 : vector<16x128xf32> to vector<16x128xbf16>
    %cst_48 = arith.constant dense<0.000000e+00> : vector<16x128xf32>
    %97 = tpu.matmul %96, %1, %cst_48 {dimension_numbers = #tpu.dot_dimension_numbers<[1], [0], [0], [1], [0, 0, 1, 1], [], []>} : vector<16x128xbf16>, vector<128x128xbf16>, vector<16x128xf32> -> vector<16x128xf32>
    %98 = arith.addf %95, %97 : vector<16x128xf32>
    %99 = math.tanh %98 : vector<16x128xf32>
    %100 = arith.truncf %99 : vector<16x128xf32> to vector<16x128xbf16>
    %101 = arith.index_cast %c0_i32_45 : i32 to index
    %c0_49 = arith.constant 0 : index
    %c0_50 = arith.constant 0 : index
    %102 = vector.load %arg8[%101, %c0_49, %c0_50] : memref<8x16x128xbf16, #tpu.memory_space<vmem>>, vector<1x16x128xbf16>
    %103 = vector.shape_cast %102 : vector<1x16x128xbf16> to vector<16x128xbf16>
    %104 = vector.shape_cast %100 : vector<16x128xbf16> to vector<1x16x128xbf16>
    tpu.vector_store %arg8[%101, %c0_49, %c0_50], %104 {strides = array<i32>} : memref<8x16x128xbf16, #tpu.memory_space<vmem>>, vector<1x16x128xbf16>,
    %c1_i32_51 = arith.constant 1 : i32
    %105 = arith.index_cast %c1_i32_51 : i32 to index
    %c0_52 = arith.constant 0 : index
    %c0_53 = arith.constant 0 : index
    %106 = vector.load %arg8[%105, %c0_52, %c0_53] : memref<8x16x128xbf16, #tpu.memory_space<vmem>>, vector<1x16x128xbf16>
    %107 = vector.shape_cast %106 : vector<1x16x128xbf16> to vector<16x128xbf16>
    %108 = arith.extf %107 : vector<16x128xbf16> to vector<16x128xf32>
    %109 = arith.truncf %99 : vector<16x128xf32> to vector<16x128xbf16>
    %cst_54 = arith.constant dense<0.000000e+00> : vector<16x128xf32>
    %110 = tpu.matmul %109, %1, %cst_54 {dimension_numbers = #tpu.dot_dimension_numbers<[1], [0], [0], [1], [0, 0, 1, 1], [], []>} : vector<16x128xbf16>, vector<128x128xbf16>, vector<16x128xf32> -> vector<16x128xf32>
    %111 = arith.addf %108, %110 : vector<16x128xf32>
    %112 = math.tanh %111 : vector<16x128xf32>
    %113 = arith.truncf %112 : vector<16x128xf32> to vector<16x128xbf16>
    %114 = arith.index_cast %c1_i32_51 : i32 to index
    %c0_55 = arith.constant 0 : index
    %c0_56 = arith.constant 0 : index
    %115 = vector.load %arg8[%114, %c0_55, %c0_56] : memref<8x16x128xbf16, #tpu.memory_space<vmem>>, vector<1x16x128xbf16>
    %116 = vector.shape_cast %115 : vector<1x16x128xbf16> to vector<16x128xbf16>
    %117 = vector.shape_cast %113 : vector<16x128xbf16> to vector<1x16x128xbf16>
    tpu.vector_store %arg8[%114, %c0_55, %c0_56], %117 {strides = array<i32>} : memref<8x16x128xbf16, #tpu.memory_space<vmem>>, vector<1x16x128xbf16>,
    %c2_i32_57 = arith.constant 2 : i32
    %118 = arith.index_cast %c2_i32_57 : i32 to index
    %c0_58 = arith.constant 0 : index
    %c0_59 = arith.constant 0 : index
    %119 = vector.load %arg8[%118, %c0_58, %c0_59] : memref<8x16x128xbf16, #tpu.memory_space<vmem>>, vector<1x16x128xbf16>
    %120 = vector.shape_cast %119 : vector<1x16x128xbf16> to vector<16x128xbf16>
    %121 = arith.extf %120 : vector<16x128xbf16> to vector<16x128xf32>
    %122 = arith.truncf %112 : vector<16x128xf32> to vector<16x128xbf16>
    %cst_60 = arith.constant dense<0.000000e+00> : vector<16x128xf32>
    %123 = tpu.matmul %122, %1, %cst_60 {dimension_numbers = #tpu.dot_dimension_numbers<[1], [0], [0], [1], [0, 0, 1, 1], [], []>} : vector<16x128xbf16>, vector<128x128xbf16>, vector<16x128xf32> -> vector<16x128xf32>
    %124 = arith.addf %121, %123 : vector<16x128xf32>
    %125 = math.tanh %124 : vector<16x128xf32>
    %126 = arith.truncf %125 : vector<16x128xf32> to vector<16x128xbf16>
    %127 = arith.index_cast %c2_i32_57 : i32 to index
    %c0_61 = arith.constant 0 : index
    %c0_62 = arith.constant 0 : index
    %128 = vector.load %arg8[%127, %c0_61, %c0_62] : memref<8x16x128xbf16, #tpu.memory_space<vmem>>, vector<1x16x128xbf16>
    %129 = vector.shape_cast %128 : vector<1x16x128xbf16> to vector<16x128xbf16>
    %130 = vector.shape_cast %126 : vector<16x128xbf16> to vector<1x16x128xbf16>
    tpu.vector_store %arg8[%127, %c0_61, %c0_62], %130 {strides = array<i32>} : memref<8x16x128xbf16, #tpu.memory_space<vmem>>, vector<1x16x128xbf16>,
    %c3_i32_63 = arith.constant 3 : i32
    %131 = arith.index_cast %c3_i32_63 : i32 to index
    %c0_64 = arith.constant 0 : index
    %c0_65 = arith.constant 0 : index
    %132 = vector.load %arg8[%131, %c0_64, %c0_65] : memref<8x16x128xbf16, #tpu.memory_space<vmem>>, vector<1x16x128xbf16>
    %133 = vector.shape_cast %132 : vector<1x16x128xbf16> to vector<16x128xbf16>
    %134 = arith.extf %133 : vector<16x128xbf16> to vector<16x128xf32>
    %135 = arith.truncf %125 : vector<16x128xf32> to vector<16x128xbf16>
    %cst_66 = arith.constant dense<0.000000e+00> : vector<16x128xf32>
    %136 = tpu.matmul %135, %1, %cst_66 {dimension_numbers = #tpu.dot_dimension_numbers<[1], [0], [0], [1], [0, 0, 1, 1], [], []>} : vector<16x128xbf16>, vector<128x128xbf16>, vector<16x128xf32> -> vector<16x128xf32>
    %137 = arith.addf %134, %136 : vector<16x128xf32>
    %138 = math.tanh %137 : vector<16x128xf32>
    %139 = arith.truncf %138 : vector<16x128xf32> to vector<16x128xbf16>
    %140 = arith.index_cast %c3_i32_63 : i32 to index
    %c0_67 = arith.constant 0 : index
    %c0_68 = arith.constant 0 : index
    %141 = vector.load %arg8[%140, %c0_67, %c0_68] : memref<8x16x128xbf16, #tpu.memory_space<vmem>>, vector<1x16x128xbf16>
    %142 = vector.shape_cast %141 : vector<1x16x128xbf16> to vector<16x128xbf16>
    %143 = vector.shape_cast %139 : vector<16x128xbf16> to vector<1x16x128xbf16>
    tpu.vector_store %arg8[%140, %c0_67, %c0_68], %143 {strides = array<i32>} : memref<8x16x128xbf16, #tpu.memory_space<vmem>>, vector<1x16x128xbf16>,
    %c4_i32_69 = arith.constant 4 : i32
    %144 = arith.index_cast %c4_i32_69 : i32 to index
    %c0_70 = arith.constant 0 : index
    %c0_71 = arith.constant 0 : index
    %145 = vector.load %arg8[%144, %c0_70, %c0_71] : memref<8x16x128xbf16, #tpu.memory_space<vmem>>, vector<1x16x128xbf16>
    %146 = vector.shape_cast %145 : vector<1x16x128xbf16> to vector<16x128xbf16>
    %147 = arith.extf %146 : vector<16x128xbf16> to vector<16x128xf32>
    %148 = arith.truncf %138 : vector<16x128xf32> to vector<16x128xbf16>
    %cst_72 = arith.constant dense<0.000000e+00> : vector<16x128xf32>
    %149 = tpu.matmul %148, %1, %cst_72 {dimension_numbers = #tpu.dot_dimension_numbers<[1], [0], [0], [1], [0, 0, 1, 1], [], []>} : vector<16x128xbf16>, vector<128x128xbf16>, vector<16x128xf32> -> vector<16x128xf32>
    %150 = arith.addf %147, %149 : vector<16x128xf32>
    %151 = math.tanh %150 : vector<16x128xf32>
    %152 = arith.truncf %151 : vector<16x128xf32> to vector<16x128xbf16>
    %153 = arith.index_cast %c4_i32_69 : i32 to index
    %c0_73 = arith.constant 0 : index
    %c0_74 = arith.constant 0 : index
    %154 = vector.load %arg8[%153, %c0_73, %c0_74] : memref<8x16x128xbf16, #tpu.memory_space<vmem>>, vector<1x16x128xbf16>
    %155 = vector.shape_cast %154 : vector<1x16x128xbf16> to vector<16x128xbf16>
    %156 = vector.shape_cast %152 : vector<16x128xbf16> to vector<1x16x128xbf16>
    tpu.vector_store %arg8[%153, %c0_73, %c0_74], %156 {strides = array<i32>} : memref<8x16x128xbf16, #tpu.memory_space<vmem>>, vector<1x16x128xbf16>,
    %c5_i32_75 = arith.constant 5 : i32
    %157 = arith.index_cast %c5_i32_75 : i32 to index
    %c0_76 = arith.constant 0 : index
    %c0_77 = arith.constant 0 : index
    %158 = vector.load %arg8[%157, %c0_76, %c0_77] : memref<8x16x128xbf16, #tpu.memory_space<vmem>>, vector<1x16x128xbf16>
    %159 = vector.shape_cast %158 : vector<1x16x128xbf16> to vector<16x128xbf16>
    %160 = arith.extf %159 : vector<16x128xbf16> to vector<16x128xf32>
    %161 = arith.truncf %151 : vector<16x128xf32> to vector<16x128xbf16>
    %cst_78 = arith.constant dense<0.000000e+00> : vector<16x128xf32>
    %162 = tpu.matmul %161, %1, %cst_78 {dimension_numbers = #tpu.dot_dimension_numbers<[1], [0], [0], [1], [0, 0, 1, 1], [], []>} : vector<16x128xbf16>, vector<128x128xbf16>, vector<16x128xf32> -> vector<16x128xf32>
    %163 = arith.addf %160, %162 : vector<16x128xf32>
    %164 = math.tanh %163 : vector<16x128xf32>
    %165 = arith.truncf %164 : vector<16x128xf32> to vector<16x128xbf16>
    %166 = arith.index_cast %c5_i32_75 : i32 to index
    %c0_79 = arith.constant 0 : index
    %c0_80 = arith.constant 0 : index
    %167 = vector.load %arg8[%166, %c0_79, %c0_80] : memref<8x16x128xbf16, #tpu.memory_space<vmem>>, vector<1x16x128xbf16>
    %168 = vector.shape_cast %167 : vector<1x16x128xbf16> to vector<16x128xbf16>
    %169 = vector.shape_cast %165 : vector<16x128xbf16> to vector<1x16x128xbf16>
    tpu.vector_store %arg8[%166, %c0_79, %c0_80], %169 {strides = array<i32>} : memref<8x16x128xbf16, #tpu.memory_space<vmem>>, vector<1x16x128xbf16>,
    %c6_i32_81 = arith.constant 6 : i32
    %170 = arith.index_cast %c6_i32_81 : i32 to index
    %c0_82 = arith.constant 0 : index
    %c0_83 = arith.constant 0 : index
    %171 = vector.load %arg8[%170, %c0_82, %c0_83] : memref<8x16x128xbf16, #tpu.memory_space<vmem>>, vector<1x16x128xbf16>
    %172 = vector.shape_cast %171 : vector<1x16x128xbf16> to vector<16x128xbf16>
    %173 = arith.extf %172 : vector<16x128xbf16> to vector<16x128xf32>
    %174 = arith.truncf %164 : vector<16x128xf32> to vector<16x128xbf16>
    %cst_84 = arith.constant dense<0.000000e+00> : vector<16x128xf32>
    %175 = tpu.matmul %174, %1, %cst_84 {dimension_numbers = #tpu.dot_dimension_numbers<[1], [0], [0], [1], [0, 0, 1, 1], [], []>} : vector<16x128xbf16>, vector<128x128xbf16>, vector<16x128xf32> -> vector<16x128xf32>
    %176 = arith.addf %173, %175 : vector<16x128xf32>
    %177 = math.tanh %176 : vector<16x128xf32>
    %178 = arith.truncf %177 : vector<16x128xf32> to vector<16x128xbf16>
    %179 = arith.index_cast %c6_i32_81 : i32 to index
    %c0_85 = arith.constant 0 : index
    %c0_86 = arith.constant 0 : index
    %180 = vector.load %arg8[%179, %c0_85, %c0_86] : memref<8x16x128xbf16, #tpu.memory_space<vmem>>, vector<1x16x128xbf16>
    %181 = vector.shape_cast %180 : vector<1x16x128xbf16> to vector<16x128xbf16>
    %182 = vector.shape_cast %178 : vector<16x128xbf16> to vector<1x16x128xbf16>
    tpu.vector_store %arg8[%179, %c0_85, %c0_86], %182 {strides = array<i32>} : memref<8x16x128xbf16, #tpu.memory_space<vmem>>, vector<1x16x128xbf16>,
    %c7_i32_87 = arith.constant 7 : i32
    %183 = arith.index_cast %c7_i32_87 : i32 to index
    %c0_88 = arith.constant 0 : index
    %c0_89 = arith.constant 0 : index
    %184 = vector.load %arg8[%183, %c0_88, %c0_89] : memref<8x16x128xbf16, #tpu.memory_space<vmem>>, vector<1x16x128xbf16>
    %185 = vector.shape_cast %184 : vector<1x16x128xbf16> to vector<16x128xbf16>
    %186 = arith.extf %185 : vector<16x128xbf16> to vector<16x128xf32>
    %187 = arith.truncf %177 : vector<16x128xf32> to vector<16x128xbf16>
    %cst_90 = arith.constant dense<0.000000e+00> : vector<16x128xf32>
    %188 = tpu.matmul %187, %1, %cst_90 {dimension_numbers = #tpu.dot_dimension_numbers<[1], [0], [0], [1], [0, 0, 1, 1], [], []>} : vector<16x128xbf16>, vector<128x128xbf16>, vector<16x128xf32> -> vector<16x128xf32>
    %189 = arith.addf %186, %188 : vector<16x128xf32>
    %190 = math.tanh %189 : vector<16x128xf32>
    %191 = arith.truncf %190 : vector<16x128xf32> to vector<16x128xbf16>
    %192 = arith.index_cast %c7_i32_87 : i32 to index
    %c0_91 = arith.constant 0 : index
    %c0_92 = arith.constant 0 : index
    %193 = vector.load %arg8[%192, %c0_91, %c0_92] : memref<8x16x128xbf16, #tpu.memory_space<vmem>>, vector<1x16x128xbf16>
    %194 = vector.shape_cast %193 : vector<1x16x128xbf16> to vector<16x128xbf16>
    %195 = vector.shape_cast %191 : vector<16x128xbf16> to vector<1x16x128xbf16>
    tpu.vector_store %arg8[%192, %c0_91, %c0_92], %195 {strides = array<i32>} : memref<8x16x128xbf16, #tpu.memory_space<vmem>>, vector<1x16x128xbf16>,
    %c8_i32_93 = arith.constant 8 : i32
    %cst_94 = arith.constant 0xFF800000 : f32
    %196 = vector.broadcast %cst_94 : f32 to vector<16x1xf32>
    %cst_95 = arith.constant 0.000000e+00 : f32
    %197 = vector.broadcast %cst_95 : f32 to vector<16x1xf32>
    %cst_96 = arith.constant 0.000000e+00 : f32
    %198 = vector.broadcast %cst_96 : f32 to vector<16x128xf32>
    %c0_i32_97 = arith.constant 0 : i32
    %199 = arith.index_cast %c0_i32_97 : i32 to index
    %c0_98 = arith.constant 0 : index
    %c0_99 = arith.constant 0 : index
    %200 = vector.load %arg8[%199, %c0_98, %c0_99] : memref<8x16x128xbf16, #tpu.memory_space<vmem>>, vector<1x16x128xbf16>
    %201 = vector.shape_cast %200 : vector<1x16x128xbf16> to vector<16x128xbf16>
    %202 = arith.extf %201 : vector<16x128xbf16> to vector<16x128xf32>
    %203 = arith.mulf %202, %190 : vector<16x128xf32>
    %cst_100 = arith.constant dense<0.000000e+00> : vector<16xf32>
    %204 = vector.multi_reduction <add>, %203, %cst_100 [1] : vector<16x128xf32> to vector<16xf32>
    %205 = vector.shape_cast %204 : vector<16xf32> to vector<16x1xf32>
    %206 = arith.maximumf %196, %205 : vector<16x1xf32>
    %207 = arith.subf %196, %206 : vector<16x1xf32>
    %208 = math.exp %207 : vector<16x1xf32>
    %209 = arith.subf %205, %206 : vector<16x1xf32>
    %210 = math.exp %209 : vector<16x1xf32>
    %211 = arith.mulf %208, %197 : vector<16x1xf32>
    %212 = arith.addf %211, %210 : vector<16x1xf32>
    %213 = vector.broadcast %208 : vector<16x1xf32> to vector<16x128xf32>
    %214 = arith.mulf %213, %198 : vector<16x128xf32>
    %215 = vector.broadcast %210 : vector<16x1xf32> to vector<16x128xf32>
    %216 = arith.mulf %215, %202 : vector<16x128xf32>
    %217 = arith.addf %214, %216 : vector<16x128xf32>
    %c1_i32_101 = arith.constant 1 : i32
    %218 = arith.index_cast %c1_i32_101 : i32 to index
    %c0_102 = arith.constant 0 : index
    %c0_103 = arith.constant 0 : index
    %219 = vector.load %arg8[%218, %c0_102, %c0_103] : memref<8x16x128xbf16, #tpu.memory_space<vmem>>, vector<1x16x128xbf16>
    %220 = vector.shape_cast %219 : vector<1x16x128xbf16> to vector<16x128xbf16>
    %221 = arith.extf %220 : vector<16x128xbf16> to vector<16x128xf32>
    %222 = arith.mulf %221, %190 : vector<16x128xf32>
    %cst_104 = arith.constant dense<0.000000e+00> : vector<16xf32>
    %223 = vector.multi_reduction <add>, %222, %cst_104 [1] : vector<16x128xf32> to vector<16xf32>
    %224 = vector.shape_cast %223 : vector<16xf32> to vector<16x1xf32>
    %225 = arith.maximumf %206, %224 : vector<16x1xf32>
    %226 = arith.subf %206, %225 : vector<16x1xf32>
    %227 = math.exp %226 : vector<16x1xf32>
    %228 = arith.subf %224, %225 : vector<16x1xf32>
    %229 = math.exp %228 : vector<16x1xf32>
    %230 = arith.mulf %227, %212 : vector<16x1xf32>
    %231 = arith.addf %230, %229 : vector<16x1xf32>
    %232 = vector.broadcast %227 : vector<16x1xf32> to vector<16x128xf32>
    %233 = arith.mulf %232, %217 : vector<16x128xf32>
    %234 = vector.broadcast %229 : vector<16x1xf32> to vector<16x128xf32>
    %235 = arith.mulf %234, %221 : vector<16x128xf32>
    %236 = arith.addf %233, %235 : vector<16x128xf32>
    %c2_i32_105 = arith.constant 2 : i32
    %237 = arith.index_cast %c2_i32_105 : i32 to index
    %c0_106 = arith.constant 0 : index
    %c0_107 = arith.constant 0 : index
    %238 = vector.load %arg8[%237, %c0_106, %c0_107] : memref<8x16x128xbf16, #tpu.memory_space<vmem>>, vector<1x16x128xbf16>
    %239 = vector.shape_cast %238 : vector<1x16x128xbf16> to vector<16x128xbf16>
    %240 = arith.extf %239 : vector<16x128xbf16> to vector<16x128xf32>
    %241 = arith.mulf %240, %190 : vector<16x128xf32>
    %cst_108 = arith.constant dense<0.000000e+00> : vector<16xf32>
    %242 = vector.multi_reduction <add>, %241, %cst_108 [1] : vector<16x128xf32> to vector<16xf32>
    %243 = vector.shape_cast %242 : vector<16xf32> to vector<16x1xf32>
    %244 = arith.maximumf %225, %243 : vector<16x1xf32>
    %245 = arith.subf %225, %244 : vector<16x1xf32>
    %246 = math.exp %245 : vector<16x1xf32>
    %247 = arith.subf %243, %244 : vector<16x1xf32>
    %248 = math.exp %247 : vector<16x1xf32>
    %249 = arith.mulf %246, %231 : vector<16x1xf32>
    %250 = arith.addf %249, %248 : vector<16x1xf32>
    %251 = vector.broadcast %246 : vector<16x1xf32> to vector<16x128xf32>
    %252 = arith.mulf %251, %236 : vector<16x128xf32>
    %253 = vector.broadcast %248 : vector<16x1xf32> to vector<16x128xf32>
    %254 = arith.mulf %253, %240 : vector<16x128xf32>
    %255 = arith.addf %252, %254 : vector<16x128xf32>
    %c3_i32_109 = arith.constant 3 : i32
    %256 = arith.index_cast %c3_i32_109 : i32 to index
    %c0_110 = arith.constant 0 : index
    %c0_111 = arith.constant 0 : index
    %257 = vector.load %arg8[%256, %c0_110, %c0_111] : memref<8x16x128xbf16, #tpu.memory_space<vmem>>, vector<1x16x128xbf16>
    %258 = vector.shape_cast %257 : vector<1x16x128xbf16> to vector<16x128xbf16>
    %259 = arith.extf %258 : vector<16x128xbf16> to vector<16x128xf32>
    %260 = arith.mulf %259, %190 : vector<16x128xf32>
    %cst_112 = arith.constant dense<0.000000e+00> : vector<16xf32>
    %261 = vector.multi_reduction <add>, %260, %cst_112 [1] : vector<16x128xf32> to vector<16xf32>
    %262 = vector.shape_cast %261 : vector<16xf32> to vector<16x1xf32>
    %263 = arith.maximumf %244, %262 : vector<16x1xf32>
    %264 = arith.subf %244, %263 : vector<16x1xf32>
    %265 = math.exp %264 : vector<16x1xf32>
    %266 = arith.subf %262, %263 : vector<16x1xf32>
    %267 = math.exp %266 : vector<16x1xf32>
    %268 = arith.mulf %265, %250 : vector<16x1xf32>
    %269 = arith.addf %268, %267 : vector<16x1xf32>
    %270 = vector.broadcast %265 : vector<16x1xf32> to vector<16x128xf32>
    %271 = arith.mulf %270, %255 : vector<16x128xf32>
    %272 = vector.broadcast %267 : vector<16x1xf32> to vector<16x128xf32>
    %273 = arith.mulf %272, %259 : vector<16x128xf32>
    %274 = arith.addf %271, %273 : vector<16x128xf32>
    %c4_i32_113 = arith.constant 4 : i32
    %275 = arith.index_cast %c4_i32_113 : i32 to index
    %c0_114 = arith.constant 0 : index
    %c0_115 = arith.constant 0 : index
    %276 = vector.load %arg8[%275, %c0_114, %c0_115] : memref<8x16x128xbf16, #tpu.memory_space<vmem>>, vector<1x16x128xbf16>
    %277 = vector.shape_cast %276 : vector<1x16x128xbf16> to vector<16x128xbf16>
    %278 = arith.extf %277 : vector<16x128xbf16> to vector<16x128xf32>
    %279 = arith.mulf %278, %190 : vector<16x128xf32>
    %cst_116 = arith.constant dense<0.000000e+00> : vector<16xf32>
    %280 = vector.multi_reduction <add>, %279, %cst_116 [1] : vector<16x128xf32> to vector<16xf32>
    %281 = vector.shape_cast %280 : vector<16xf32> to vector<16x1xf32>
    %282 = arith.maximumf %263, %281 : vector<16x1xf32>
    %283 = arith.subf %263, %282 : vector<16x1xf32>
    %284 = math.exp %283 : vector<16x1xf32>
    %285 = arith.subf %281, %282 : vector<16x1xf32>
    %286 = math.exp %285 : vector<16x1xf32>
    %287 = arith.mulf %284, %269 : vector<16x1xf32>
    %288 = arith.addf %287, %286 : vector<16x1xf32>
    %289 = vector.broadcast %284 : vector<16x1xf32> to vector<16x128xf32>
    %290 = arith.mulf %289, %274 : vector<16x128xf32>
    %291 = vector.broadcast %286 : vector<16x1xf32> to vector<16x128xf32>
    %292 = arith.mulf %291, %278 : vector<16x128xf32>
    %293 = arith.addf %290, %292 : vector<16x128xf32>
    %c5_i32_117 = arith.constant 5 : i32
    %294 = arith.index_cast %c5_i32_117 : i32 to index
    %c0_118 = arith.constant 0 : index
    %c0_119 = arith.constant 0 : index
    %295 = vector.load %arg8[%294, %c0_118, %c0_119] : memref<8x16x128xbf16, #tpu.memory_space<vmem>>, vector<1x16x128xbf16>
    %296 = vector.shape_cast %295 : vector<1x16x128xbf16> to vector<16x128xbf16>
    %297 = arith.extf %296 : vector<16x128xbf16> to vector<16x128xf32>
    %298 = arith.mulf %297, %190 : vector<16x128xf32>
    %cst_120 = arith.constant dense<0.000000e+00> : vector<16xf32>
    %299 = vector.multi_reduction <add>, %298, %cst_120 [1] : vector<16x128xf32> to vector<16xf32>
    %300 = vector.shape_cast %299 : vector<16xf32> to vector<16x1xf32>
    %301 = arith.maximumf %282, %300 : vector<16x1xf32>
    %302 = arith.subf %282, %301 : vector<16x1xf32>
    %303 = math.exp %302 : vector<16x1xf32>
    %304 = arith.subf %300, %301 : vector<16x1xf32>
    %305 = math.exp %304 : vector<16x1xf32>
    %306 = arith.mulf %303, %288 : vector<16x1xf32>
    %307 = arith.addf %306, %305 : vector<16x1xf32>
    %308 = vector.broadcast %303 : vector<16x1xf32> to vector<16x128xf32>
    %309 = arith.mulf %308, %293 : vector<16x128xf32>
    %310 = vector.broadcast %305 : vector<16x1xf32> to vector<16x128xf32>
    %311 = arith.mulf %310, %297 : vector<16x128xf32>
    %312 = arith.addf %309, %311 : vector<16x128xf32>
    %c6_i32_121 = arith.constant 6 : i32
    %313 = arith.index_cast %c6_i32_121 : i32 to index
    %c0_122 = arith.constant 0 : index
    %c0_123 = arith.constant 0 : index
    %314 = vector.load %arg8[%313, %c0_122, %c0_123] : memref<8x16x128xbf16, #tpu.memory_space<vmem>>, vector<1x16x128xbf16>
    %315 = vector.shape_cast %314 : vector<1x16x128xbf16> to vector<16x128xbf16>
    %316 = arith.extf %315 : vector<16x128xbf16> to vector<16x128xf32>
    %317 = arith.mulf %316, %190 : vector<16x128xf32>
    %cst_124 = arith.constant dense<0.000000e+00> : vector<16xf32>
    %318 = vector.multi_reduction <add>, %317, %cst_124 [1] : vector<16x128xf32> to vector<16xf32>
    %319 = vector.shape_cast %318 : vector<16xf32> to vector<16x1xf32>
    %320 = arith.maximumf %301, %319 : vector<16x1xf32>
    %321 = arith.subf %301, %320 : vector<16x1xf32>
    %322 = math.exp %321 : vector<16x1xf32>
    %323 = arith.subf %319, %320 : vector<16x1xf32>
    %324 = math.exp %323 : vector<16x1xf32>
    %325 = arith.mulf %322, %307 : vector<16x1xf32>
    %326 = arith.addf %325, %324 : vector<16x1xf32>
    %327 = vector.broadcast %322 : vector<16x1xf32> to vector<16x128xf32>
    %328 = arith.mulf %327, %312 : vector<16x128xf32>
    %329 = vector.broadcast %324 : vector<16x1xf32> to vector<16x128xf32>
    %330 = arith.mulf %329, %316 : vector<16x128xf32>
    %331 = arith.addf %328, %330 : vector<16x128xf32>
    %c7_i32_125 = arith.constant 7 : i32
    %332 = arith.index_cast %c7_i32_125 : i32 to index
    %c0_126 = arith.constant 0 : index
    %c0_127 = arith.constant 0 : index
    %333 = vector.load %arg8[%332, %c0_126, %c0_127] : memref<8x16x128xbf16, #tpu.memory_space<vmem>>, vector<1x16x128xbf16>
    %334 = vector.shape_cast %333 : vector<1x16x128xbf16> to vector<16x128xbf16>
    %335 = arith.extf %334 : vector<16x128xbf16> to vector<16x128xf32>
    %336 = arith.mulf %335, %190 : vector<16x128xf32>
    %cst_128 = arith.constant dense<0.000000e+00> : vector<16xf32>
    %337 = vector.multi_reduction <add>, %336, %cst_128 [1] : vector<16x128xf32> to vector<16xf32>
    %338 = vector.shape_cast %337 : vector<16xf32> to vector<16x1xf32>
    %339 = arith.maximumf %320, %338 : vector<16x1xf32>
    %340 = arith.subf %320, %339 : vector<16x1xf32>
    %341 = math.exp %340 : vector<16x1xf32>
    %342 = arith.subf %338, %339 : vector<16x1xf32>
    %343 = math.exp %342 : vector<16x1xf32>
    %344 = arith.mulf %341, %326 : vector<16x1xf32>
    %345 = arith.addf %344, %343 : vector<16x1xf32>
    %346 = vector.broadcast %341 : vector<16x1xf32> to vector<16x128xf32>
    %347 = arith.mulf %346, %331 : vector<16x128xf32>
    %348 = vector.broadcast %343 : vector<16x1xf32> to vector<16x128xf32>
    %349 = arith.mulf %348, %335 : vector<16x128xf32>
    %350 = arith.addf %347, %349 : vector<16x128xf32>
    %c8_i32_129 = arith.constant 8 : i32
    %351 = tpu.reciprocal %345 {approx = true} : vector<16x1xf32> -> vector<16x1xf32>
    %352 = vector.broadcast %351 : vector<16x1xf32> to vector<16x128xf32>
    %353 = arith.mulf %350, %352 : vector<16x128xf32>
    %354 = arith.truncf %353 : vector<16x128xf32> to vector<16x128xbf16>
    %c0_130 = arith.constant 0 : index
    %c0_131 = arith.constant 0 : index
    %355 = vector.load %arg5[%c0_130, %c0_131] : memref<128x128xbf16, #tpu.memory_space<vmem>>, vector<128x128xbf16>
    %cst_132 = arith.constant dense<0.000000e+00> : vector<16x128xf32>
    %356 = tpu.matmul %354, %355, %cst_132 {dimension_numbers = #tpu.dot_dimension_numbers<[1], [0], [0], [1], [0, 0, 1, 1], [], []>} : vector<16x128xbf16>, vector<128x128xbf16>, vector<16x128xf32> -> vector<16x128xf32>
    %c0_133 = arith.constant 0 : index
    %c0_134 = arith.constant 0 : index
    %357 = vector.load %arg6[%c0_133, %c0_134] : memref<1x128xf32, #tpu.memory_space<vmem>>, vector<1x128xf32>
    %358 = vector.broadcast %357 : vector<1x128xf32> to vector<16x128xf32>
    %359 = arith.addf %356, %358 : vector<16x128xf32>
    %c0_135 = arith.constant 0 : index
    %c0_136 = arith.constant 0 : index
    %360 = vector.load %arg7[%c0_135, %c0_136] : memref<16x128xf32, #tpu.memory_space<vmem>>, vector<16x128xf32>
    tpu.vector_store %arg7[%c0_135, %c0_136], %359 {strides = array<i32>} : memref<16x128xf32, #tpu.memory_space<vmem>>, vector<16x128xf32>,
    return
  }
  func.func @transform_0(%arg0: i32) -> (i32, i32, i32) {
    %c0_i32 = arith.constant 0 : i32
    %c0_i32_0 = arith.constant 0 : i32
    %c0_i32_1 = arith.constant 0 : i32
    return %c0_i32, %arg0, %c0_i32_0 : i32, i32, i32
  }
  func.func @transform_1(%arg0: i32) -> (i32, i32) {
    %c0_i32 = arith.constant 0 : i32
    %c0_i32_0 = arith.constant 0 : i32
    %c0_i32_1 = arith.constant 0 : i32
    return %c0_i32, %c0_i32_0 : i32, i32
  }
  func.func @transform_2(%arg0: i32) -> (i32, i32) {
    %c0_i32 = arith.constant 0 : i32
    %c0_i32_0 = arith.constant 0 : i32
    %c0_i32_1 = arith.constant 0 : i32
    return %c0_i32, %c0_i32_0 : i32, i32
  }
  func.func @transform_3(%arg0: i32) -> (i32, i32) {
    %c0_i32 = arith.constant 0 : i32
    %c0_i32_0 = arith.constant 0 : i32
    %c0_i32_1 = arith.constant 0 : i32
    return %c0_i32, %c0_i32_0 : i32, i32
  }
  func.func @transform_4(%arg0: i32) -> (i32, i32) {
    %c0_i32 = arith.constant 0 : i32
    %c0_i32_0 = arith.constant 0 : i32
    %c0_i32_1 = arith.constant 0 : i32
    return %c0_i32, %c0_i32_0 : i32, i32
  }
  func.func @transform_5(%arg0: i32) -> (i32, i32) {
    %c0_i32 = arith.constant 0 : i32
    %c0_i32_0 = arith.constant 0 : i32
    %c0_i32_1 = arith.constant 0 : i32
    return %c0_i32, %c0_i32_0 : i32, i32
  }
  func.func @transform_6(%arg0: i32) -> (i32, i32) {
    %c0_i32 = arith.constant 0 : i32
    %c0_i32_0 = arith.constant 0 : i32
    return %arg0, %c0_i32 : i32, i32
  }
}

</mosaic_0001>

<llo_original>
// kernel: tpu_custom_call.1
$region0: #{tpu_custom_call.1}
  #allocation0 [shape = 'u32[]', space=smem, size = 0x4, offset = 0x4, fixed_abs, tag = 'smem constant byte address 0x4 - core index']
  #allocation1 [shape = 'u32[72,128]{1,0:T(1,128)}', space=vmem, size = 0x9000, scoped, tag = 'internal scratch']
  #allocation2 [shape = 'bf16[8,16,128]{2,1,0:T(8,128)(2,1)}', space=vmem, size = 0x8000, scoped, tag = 'scratch operand']
  %s0 = inlined_call_operand.hbm [shape: bf16[8,16,32], index: 0, kind: input, shape index: {}]
  %s1 = inlined_call_operand.hbm [shape: bf16[32,128], index: 1, kind: input, shape index: {}]
  %s2 = inlined_call_operand.hbm [shape: bf16[128,128], index: 2, kind: input, shape index: {}]
  %s3 = inlined_call_operand.vmem [shape: f32[1,128], index: 3, kind: input, shape index: {}]
  %s4 = inlined_call_operand.hbm [shape: bf16[128,128], index: 4, kind: input, shape index: {}]
  %s5 = inlined_call_operand.vmem [shape: f32[1,128], index: 5, kind: input, shape index: {}]
  %s6 = inlined_call_operand.hbm [shape: f32[16,128], index: 6, kind: output, shape index: {}]
  %s7 = sld [smem:[#allocation0]]
  $region50: #{tpu_custom_call.1} parent=0
    _
  %s9 = ssub.s32 1, %s7
  %s10 = scalar_select 0, %s9, %s7
  $region1: #{tpu_custom_call.1} parent=0
    #allocation3 [shape = 'u8[32768]{0}', space=vmem, size = 0x8000, scoped, tag = 'input window, operand 0, single buffered']
    #allocation4 [shape = 's32[1]{0}', space=sflag, size = 0x4, scoped, tag = 'scoped memory for tpu_custom_call.1']
    #allocation5 [shape = 's32[1]{0}', space=sflag, size = 0x4, scoped, tag = 'scoped memory for tpu_custom_call.1']
    #allocation6 [shape = 'u8[8192]{0}', space=vmem, size = 0x2000, scoped, tag = 'input window, operand 1, single buffered']
    #allocation7 [shape = 's32[1]{0}', space=sflag, size = 0x4, scoped, tag = 'scoped memory for tpu_custom_call.1']
    #allocation8 [shape = 'u8[32768]{0}', space=vmem, size = 0x8000, scoped, tag = 'input window, operand 2, single buffered']
    #allocation9 [shape = 'u8[32768]{0}', space=vmem, size = 0x8000, scoped, tag = 'input window, operand 4, single buffered']
    #allocation10 [shape = 's32[1]{0}', space=sflag, size = 0x4, scoped, tag = 'scoped memory for tpu_custom_call.1']
    #allocation11 [shape = 'u8[8192]{0}', space=vmem, size = 0x2000, scoped, tag = 'output window, operand 0, single buffered']
    %11 = vsyncpa [#allocation4], 0
    %12 = vsyncpa [#allocation7], 0
    %13 = vsyncpa [#allocation10], 0
    %14 = vsyncpa [#allocation5], 0
    // Predicated region
    $region2: #{tpu_custom_call.1} parent=1 // pred_check
      _
    $region3: #{tpu_custom_call.1} parent=1 // pred_check_branch
      %16 = sbr.rel (0) target = $region5
    $region4: #{tpu_custom_call.1} parent=1 // pred_region
      %18 = vsyncadd [#allocation4], 0
      %s19 = sshll.u32 %s0, 4
      %s20 = int_to_ptr.hbm [resolvable:$true] %s19
      %s21 = sshll.u32 [#allocation3], 4
      %s22 = int_to_ptr.vmem [resolvable:$true] %s21
      %27 = dma.hbm_to_vmem [thread:$0]  %s20, 1024, %s22, [#allocation4], 64, 64, 4
    $region5: #{tpu_custom_call.1} parent=1 // pred_fallthru
      _
    // Predicated region
    $region6: #{tpu_custom_call.1} parent=1 // pred_check
      _
    $region7: #{tpu_custom_call.1} parent=1 // pred_check_branch
      %29 = sbr.rel (0) target = $region9
    $region8: #{tpu_custom_call.1} parent=1 // pred_region
      %31 = vsyncadd [#allocation7], 0
      %s32 = sshll.u32 %s1, 4
      %s33 = int_to_ptr.hbm [resolvable:$true] %s32
      %s34 = sshll.u32 [#allocation6], 4
      %s35 = int_to_ptr.vmem [resolvable:$true] %s34
      %40 = dma.hbm_to_vmem [thread:$0]  %s33, 256, %s35, [#allocation7], 64, 64, 4
    $region9: #{tpu_custom_call.1} parent=1 // pred_fallthru
      _
    // Predicated region
    $region10: #{tpu_custom_call.1} parent=1 // pred_check
      _
    $region11: #{tpu_custom_call.1} parent=1 // pred_check_branch
      %42 = sbr.rel (0) target = $region13
    $region12: #{tpu_custom_call.1} parent=1 // pred_region
      %44 = vsyncadd [#allocation7], 0
      %s45 = sshll.u32 %s2, 4
      %s46 = int_to_ptr.hbm [resolvable:$true] %s45
      %s47 = sshll.u32 [#allocation8], 4
      %s48 = int_to_ptr.vmem [resolvable:$true] %s47
      %53 = dma.hbm_to_vmem [thread:$0]  %s46, 1024, %s48, [#allocation7], 64, 64, 4
    $region13: #{tpu_custom_call.1} parent=1 // pred_fallthru
      _
    // Predicated region
    $region14: #{tpu_custom_call.1} parent=1 // pred_check
      _
    $region15: #{tpu_custom_call.1} parent=1 // pred_check_branch
      %55 = sbr.rel (0) target = $region17
    $region16: #{tpu_custom_call.1} parent=1 // pred_region
      _
    $region17: #{tpu_custom_call.1} parent=1 // pred_fallthru
      _
    // Predicated region
    $region18: #{tpu_custom_call.1} parent=1 // pred_check
      _
    $region19: #{tpu_custom_call.1} parent=1 // pred_check_branch
      %57 = sbr.rel (0) target = $region21
    $region20: #{tpu_custom_call.1} parent=1 // pred_region
      %59 = vsyncadd [#allocation10], 0
      %s60 = sshll.u32 %s4, 4
      %s61 = int_to_ptr.hbm [resolvable:$true] %s60
      %s62 = sshll.u32 [#allocation9], 4
      %s63 = int_to_ptr.vmem [resolvable:$true] %s62
      %68 = dma.hbm_to_vmem [thread:$0]  %s61, 1024, %s63, [#allocation10], 64, 64, 4
    $region21: #{tpu_custom_call.1} parent=1 // pred_fallthru
      _
    // Predicated region
    $region22: #{tpu_custom_call.1} parent=1 // pred_check
      _
    $region23: #{tpu_custom_call.1} parent=1 // pred_check_branch
      %70 = sbr.rel (0) target = $region25
    $region24: #{tpu_custom_call.1} parent=1 // pred_region
      _
    $region25: #{tpu_custom_call.1} parent=1 // pred_fallthru
      _
    // Predicated region
    $region26: #{tpu_custom_call.1} parent=1 // pred_check
      _
    $region27: #{tpu_custom_call.1} parent=1 // pred_check_branch
      %72 = sbr.rel (0) target = $region29
    $region28: #{tpu_custom_call.1} parent=1 // pred_region
      %74 = dma.done [#allocation4], 1024
    $region29: #{tpu_custom_call.1} parent=1 // pred_fallthru
      _
    // Predicated region
    $region30: #{tpu_custom_call.1} parent=1 // pred_check
      _
    $region31: #{tpu_custom_call.1} parent=1 // pred_check_branch
      %76 = sbr.rel (0) target = $region33
    $region32: #{tpu_custom_call.1} parent=1 // pred_region
      %78 = dma.done [#allocation7], 256
    $region33: #{tpu_custom_call.1} parent=1 // pred_fallthru
      _
    // Predicated region
    $region34: #{tpu_custom_call.1} parent=1 // pred_check
      _
    $region35: #{tpu_custom_call.1} parent=1 // pred_check_branch
      %80 = sbr.rel (0) target = $region37
    $region36: #{tpu_custom_call.1} parent=1 // pred_region
      %82 = dma.done [#allocation7], 1024
    $region37: #{tpu_custom_call.1} parent=1 // pred_fallthru
      _
    // Predicated region
    $region38: #{tpu_custom_call.1} parent=1 // pred_check
      _
    $region39: #{tpu_custom_call.1} parent=1 // pred_check_branch
      %84 = sbr.rel (0) target = $region41
    $region40: #{tpu_custom_call.1} parent=1 // pred_region
      %86 = dma.done [#allocation10], 1024
    $region41: #{tpu_custom_call.1} parent=1 // pred_fallthru
      _
    %v88 = vld [vmem:[#allocation6] sm:$0xf]
    %v89 = vld [vmem:[#allocation6 + $0x4] sm:$0xf]
    %v90 = vld [vmem:[#allocation6 + $0x8] sm:$0xf]
    %v91 = vld [vmem:[#allocation6 + $0xc] sm:$0xf]
    %v92 = vld [vmem:[#allocation8] sm:$0xf]
    %v93 = vld [vmem:[#allocation8 + $0x4] sm:$0xf]
    %v94 = vld [vmem:[#allocation8 + $0x8] sm:$0xf]
    %v95 = vld [vmem:[#allocation8 + $0xc] sm:$0xf]
    %v96 = vld [vmem:[#allocation8 + $0x10] sm:$0xf]
    %v97 = vld [vmem:[#allocation8 + $0x14] sm:$0xf]
    %v98 = vld [vmem:[#allocation8 + $0x18] sm:$0xf]
    %v99 = vld [vmem:[#allocation8 + $0x1c] sm:$0xf]
    %v100 = vld [vmem:[#allocation8 + $0x20] sm:$0xf]
    %v101 = vld [vmem:[#allocation8 + $0x24] sm:$0xf]
    %v102 = vld [vmem:[#allocation8 + $0x28] sm:$0xf]
    %v103 = vld [vmem:[#allocation8 + $0x2c] sm:$0xf]
    %v104 = vld [vmem:[#allocation8 + $0x30] sm:$0xf]
    %v105 = vld [vmem:[#allocation8 + $0x34] sm:$0xf]
    %v106 = vld [vmem:[#allocation8 + $0x38] sm:$0xf]
    %v107 = vld [vmem:[#allocation8 + $0x3c] sm:$0xf]
    %v108 = vld [vmem:[%s3] sm:$0x1]
    %v109 = vld [vmem:[#allocation3] sm:$0xf]
    %v110 = vld [vmem:[#allocation3 + $0x4] sm:$0xf]
    %v112 = vperm.slane %v108, 0
    %v116 = vunpack.c.l.b16 %v109
    %v117 = vunpack.c.l.b16 %v110
    %v118 = vpack.c.b16 %v117, %v116
    %v123 = vunpack.c.l.b16 %v88
    %v124 = vunpack.c.l.b16 %v89
    %v125 = vunpack.c.l.b16 %v90
    %v126 = vunpack.c.l.b16 %v91
    %v127 = vpack.c.b16 %v124, %v123
    %v128 = vpack.c.b16 %v126, %v125
    %vm131 = vcmask 261120
    %v133 = vsel %vm131, %v118, 0
    %135 = vmatpush.bf16.msra.mxu0 0
    %136 = vmatpush.bf16.msra.mxu0 0
    %137 = vmatpush.bf16.msra.mxu0 0
    %138 = vmatpush.bf16.msra.mxu0 0
    %139 = vmatpush.bf16.msra.mxu0 0
    %140 = vmatpush.bf16.msra.mxu0 0
    %141 = vmatpush.bf16.msra.mxu0 %v128
    %142 = vmatpush.bf16.msra.mxu0 %v127
    %143 = vmatmul.bf16.gmra.mxu0 %v133
    %v144 = vpop.f32.mrf.mxu0
    %v145 = vadd.f32 %v112, %v144
    %v146 = vpop.f32.mrf.mxu0
    %v147 = vadd.f32 %v112, %v146
    %148 = vdwg.mxu0
    %v149 = vpack.c.bf16 %v145, %v145
    %v150 = vpack.c.bf16 %v147, %v147
    %151 = vst [vmem:[#allocation2] sm:$0xf] %v149
    %152 = vst [vmem:[#allocation2 + $0x4] sm:$0xf] %v150
    %s153 = scalar_lea.vmem [#allocation3], 8
    %v154 = vld [vmem:[%s153] sm:$0xf]
    %v155 = vld [vmem:[%s153 + $0x4] sm:$0xf]
    %v158 = vunpack.c.l.b16 %v154
    %v159 = vunpack.c.l.b16 %v155
    %v160 = vpack.c.b16 %v159, %v158
    %v162 = vsel %vm131, %v160, 0
    %164 = vmatpush.bf16.msra.mxu0 0
    %165 = vmatpush.bf16.msra.mxu0 0
    %166 = vmatpush.bf16.msra.mxu0 0
    %167 = vmatpush.bf16.msra.mxu0 0
    %168 = vmatpush.bf16.msra.mxu0 0
    %169 = vmatpush.bf16.msra.mxu0 0
    %170 = vmatpush.bf16.msra.mxu0 %v128
    %171 = vmatpush.bf16.msra.mxu0 %v127
    %172 = vmatmul.bf16.gmra.mxu0 %v162
    %v173 = vpop.f32.mrf.mxu0
    %v174 = vadd.f32 %v112, %v173
    %v175 = vpop.f32.mrf.mxu0
    %v176 = vadd.f32 %v112, %v175
    %177 = vdwg.mxu0
    %v178 = vpack.c.bf16 %v174, %v174
    %v179 = vpack.c.bf16 %v176, %v176
    %s180 = scalar_lea.vmem [#allocation2], 8
    %181 = vst [vmem:[%s180] sm:$0xf] %v178
    %182 = vst [vmem:[%s180 + $0x4] sm:$0xf] %v179
    %s183 = scalar_lea.vmem [#allocation3], 16
    %v184 = vld [vmem:[%s183] sm:$0xf]
    %v185 = vld [vmem:[%s183 + $0x4] sm:$0xf]
    %v188 = vunpack.c.l.b16 %v184
    %v189 = vunpack.c.l.b16 %v185
    %v190 = vpack.c.b16 %v189, %v188
    %v192 = vsel %vm131, %v190, 0
    %194 = vmatpush.bf16.msra.mxu0 0
    %195 = vmatpush.bf16.msra.mxu0 0
    %196 = vmatpush.bf16.msra.mxu0 0
    %197 = vmatpush.bf16.msra.mxu0 0
    %198 = vmatpush.bf16.msra.mxu0 0
    %199 = vmatpush.bf16.msra.mxu0 0
    %200 = vmatpush.bf16.msra.mxu0 %v128
    %201 = vmatpush.bf16.msra.mxu0 %v127
    %202 = vmatmul.bf16.gmra.mxu0 %v192
    %v203 = vpop.f32.mrf.mxu0
    %v204 = vadd.f32 %v112, %v203
    %v205 = vpop.f32.mrf.mxu0
    %v206 = vadd.f32 %v112, %v205
    %207 = vdwg.mxu0
    %v208 = vpack.c.bf16 %v204, %v204
    %v209 = vpack.c.bf16 %v206, %v206
    %s210 = scalar_lea.vmem [#allocation2], 16
    %211 = vst [vmem:[%s210] sm:$0xf] %v208
    %212 = vst [vmem:[%s210 + $0x4] sm:$0xf] %v209
    %s213 = scalar_lea.vmem [#allocation3], 24
    %v214 = vld [vmem:[%s213] sm:$0xf]
    %v215 = vld [vmem:[%s213 + $0x4] sm:$0xf]
    %v218 = vunpack.c.l.b16 %v214
    %v219 = vunpack.c.l.b16 %v215
    %v220 = vpack.c.b16 %v219, %v218
    %v222 = vsel %vm131, %v220, 0
    %224 = vmatpush.bf16.msra.mxu0 0
    %225 = vmatpush.bf16.msra.mxu0 0
    %226 = vmatpush.bf16.msra.mxu0 0
    %227 = vmatpush.bf16.msra.mxu0 0
    %228 = vmatpush.bf16.msra.mxu0 0
    %229 = vmatpush.bf16.msra.mxu0 0
    %230 = vmatpush.bf16.msra.mxu0 %v128
    %231 = vmatpush.bf16.msra.mxu0 %v127
    %232 = vmatmul.bf16.gmra.mxu0 %v222
    %v233 = vpop.f32.mrf.mxu0
    %v234 = vadd.f32 %v112, %v233
    %v235 = vpop.f32.mrf.mxu0
    %v236 = vadd.f32 %v112, %v235
    %237 = vdwg.mxu0
    %v238 = vpack.c.bf16 %v234, %v234
    %v239 = vpack.c.bf16 %v236, %v236
    %s240 = scalar_lea.vmem [#allocation2], 24
    %241 = vst [vmem:[%s240] sm:$0xf] %v238
    %242 = vst [vmem:[%s240 + $0x4] sm:$0xf] %v239
    %s243 = scalar_lea.vmem [#allocation3], 32
    %v244 = vld [vmem:[%s243] sm:$0xf]
    %v245 = vld [vmem:[%s243 + $0x4] sm:$0xf]
    %v248 = vunpack.c.l.b16 %v244
    %v249 = vunpack.c.l.b16 %v245
    %v250 = vpack.c.b16 %v249, %v248
    %v252 = vsel %vm131, %v250, 0
    %254 = vmatpush.bf16.msra.mxu0 0
    %255 = vmatpush.bf16.msra.mxu0 0
    %256 = vmatpush.bf16.msra.mxu0 0
    %257 = vmatpush.bf16.msra.mxu0 0
    %258 = vmatpush.bf16.msra.mxu0 0
    %259 = vmatpush.bf16.msra.mxu0 0
    %260 = vmatpush.bf16.msra.mxu0 %v128
    %261 = vmatpush.bf16.msra.mxu0 %v127
    %262 = vmatmul.bf16.gmra.mxu0 %v252
    %v263 = vpop.f32.mrf.mxu0
    %v264 = vadd.f32 %v112, %v263
    %v265 = vpop.f32.mrf.mxu0
    %v266 = vadd.f32 %v112, %v265
    %267 = vdwg.mxu0
    %v268 = vpack.c.bf16 %v264, %v264
    %v269 = vpack.c.bf16 %v266, %v266
    %s270 = scalar_lea.vmem [#allocation2], 32
    %271 = vst [vmem:[%s270] sm:$0xf] %v268
    %272 = vst [vmem:[%s270 + $0x4] sm:$0xf] %v269
    %s273 = scalar_lea.vmem [#allocation3], 40
    %v274 = vld [vmem:[%s273] sm:$0xf]
    %v275 = vld [vmem:[%s273 + $0x4] sm:$0xf]
    %v278 = vunpack.c.l.b16 %v274
    %v279 = vunpack.c.l.b16 %v275
    %v280 = vpack.c.b16 %v279, %v278
    %v282 = vsel %vm131, %v280, 0
    %284 = vmatpush.bf16.msra.mxu0 0
    %285 = vmatpush.bf16.msra.mxu0 0
    %286 = vmatpush.bf16.msra.mxu0 0
    %287 = vmatpush.bf16.msra.mxu0 0
    %288 = vmatpush.bf16.msra.mxu0 0
    %289 = vmatpush.bf16.msra.mxu0 0
    %290 = vmatpush.bf16.msra.mxu0 %v128
    %291 = vmatpush.bf16.msra.mxu0 %v127
    %292 = vmatmul.bf16.gmra.mxu0 %v282
    %v293 = vpop.f32.mrf.mxu0
    %v294 = vadd.f32 %v112, %v293
    %v295 = vpop.f32.mrf.mxu0
    %v296 = vadd.f32 %v112, %v295
    %297 = vdwg.mxu0
    %v298 = vpack.c.bf16 %v294, %v294
    %v299 = vpack.c.bf16 %v296, %v296
    %s300 = scalar_lea.vmem [#allocation2], 40
    %301 = vst [vmem:[%s300] sm:$0xf] %v298
    %302 = vst [vmem:[%s300 + $0x4] sm:$0xf] %v299
    %s303 = scalar_lea.vmem [#allocation3], 48
    %v304 = vld [vmem:[%s303] sm:$0xf]
    %v305 = vld [vmem:[%s303 + $0x4] sm:$0xf]
    %v308 = vunpack.c.l.b16 %v304
    %v309 = vunpack.c.l.b16 %v305
    %v310 = vpack.c.b16 %v309, %v308
    %v312 = vsel %vm131, %v310, 0
    %314 = vmatpush.bf16.msra.mxu0 0
    %315 = vmatpush.bf16.msra.mxu0 0
    %316 = vmatpush.bf16.msra.mxu0 0
    %317 = vmatpush.bf16.msra.mxu0 0
    %318 = vmatpush.bf16.msra.mxu0 0
    %319 = vmatpush.bf16.msra.mxu0 0
    %320 = vmatpush.bf16.msra.mxu0 %v128
    %321 = vmatpush.bf16.msra.mxu0 %v127
    %322 = vmatmul.bf16.gmra.mxu0 %v312
    %v323 = vpop.f32.mrf.mxu0
    %v324 = vadd.f32 %v112, %v323
    %v325 = vpop.f32.mrf.mxu0
    %v326 = vadd.f32 %v112, %v325
    %327 = vdwg.mxu0
    %v328 = vpack.c.bf16 %v324, %v324
    %v329 = vpack.c.bf16 %v326, %v326
    %s330 = scalar_lea.vmem [#allocation2], 48
    %331 = vst [vmem:[%s330] sm:$0xf] %v328
    %332 = vst [vmem:[%s330 + $0x4] sm:$0xf] %v329
    %s333 = scalar_lea.vmem [#allocation3], 56
    %v334 = vld [vmem:[%s333] sm:$0xf]
    %v335 = vld [vmem:[%s333 + $0x4] sm:$0xf]
    %v338 = vunpack.c.l.b16 %v334
    %v339 = vunpack.c.l.b16 %v335
    %v340 = vpack.c.b16 %v339, %v338
    %v342 = vsel %vm131, %v340, 0
    %344 = vmatpush.bf16.msra.mxu0 0
    %345 = vmatpush.bf16.msra.mxu0 0
    %346 = vmatpush.bf16.msra.mxu0 0
    %347 = vmatpush.bf16.msra.mxu0 0
    %348 = vmatpush.bf16.msra.mxu0 0
    %349 = vmatpush.bf16.msra.mxu0 0
    %350 = vmatpush.bf16.msra.mxu0 %v128
    %351 = vmatpush.bf16.msra.mxu0 %v127
    %352 = vmatmul.bf16.gmra.mxu0 %v342
    %v353 = vpop.f32.mrf.mxu0
    %v354 = vadd.f32 %v112, %v353
    %v355 = vpop.f32.mrf.mxu0
    %v356 = vadd.f32 %v112, %v355
    %357 = vdwg.mxu0
    %v358 = vpack.c.bf16 %v354, %v354
    %v359 = vpack.c.bf16 %v356, %v356
    %s360 = scalar_lea.vmem [#allocation2], 56
    %361 = vst [vmem:[%s360] sm:$0xf] %v358
    %362 = vst [vmem:[%s360 + $0x4] sm:$0xf] %v359
    %v363 = vld [vmem:[#allocation2] sm:$0xf]
    %v364 = vld [vmem:[#allocation2 + $0x4] sm:$0xf]
    %v365 = vunpack.c.l.bf16 %v363
    %v366 = vunpack.c.l.bf16 %v364
    %v383 = vunpack.c.l.b16 %v92
    %v384 = vunpack.c.l.b16 %v93
    %v385 = vunpack.c.l.b16 %v94
    %v386 = vunpack.c.l.b16 %v95
    %v387 = vunpack.c.l.b16 %v96
    %v388 = vunpack.c.l.b16 %v97
    %v389 = vunpack.c.l.b16 %v98
    %v390 = vunpack.c.l.b16 %v99
    %v391 = vunpack.c.l.b16 %v100
    %v392 = vunpack.c.l.b16 %v101
    %v393 = vunpack.c.l.b16 %v102
    %v394 = vunpack.c.l.b16 %v103
    %v395 = vunpack.c.l.b16 %v104
    %v396 = vunpack.c.l.b16 %v105
    %v397 = vunpack.c.l.b16 %v106
    %v398 = vunpack.c.l.b16 %v107
    %v399 = vpack.c.b16 %v384, %v383
    %v400 = vpack.c.b16 %v386, %v385
    %v401 = vpack.c.b16 %v388, %v387
    %v402 = vpack.c.b16 %v390, %v389
    %v403 = vpack.c.b16 %v392, %v391
    %v404 = vpack.c.b16 %v394, %v393
    %v405 = vpack.c.b16 %v396, %v395
    %v406 = vpack.c.b16 %v398, %v397
    %415 = vmatpush.bf16.msra.mxu0 %v406
    %416 = vmatpush.bf16.msra.mxu0 %v405
    %417 = vmatpush.bf16.msra.mxu0 %v404
    %418 = vmatpush.bf16.msra.mxu0 %v403
    %419 = vmatpush.bf16.msra.mxu0 %v402
    %420 = vmatpush.bf16.msra.mxu0 %v401
    %421 = vmatpush.bf16.msra.mxu0 %v400
    %422 = vmatpush.bf16.msra.mxu0 %v399
    %423 = vmatmul.bf16.gmra.mxu0 0
    %v424 = vpop.f32.mrf.mxu0
    %v425 = vadd.f32 0.0, %v424
    %v426 = vpop.f32.mrf.mxu0
    %v427 = vadd.f32 0.0, %v426
    %428 = vdwg.mxu0
    %v429 = vadd.f32 %v365, %v425
    %v430 = vadd.f32 %v366, %v427
    %v431 = vtanh.pop %v429
    %v432 = vtanh.pop %v430
    %v433 = vpack.c.bf16 %v431, %v431
    %v434 = vpack.c.bf16 %v432, %v432
    %435 = vst [vmem:[#allocation2] sm:$0xf] %v433
    %436 = vst [vmem:[#allocation2 + $0x4] sm:$0xf] %v434
    %v437 = vld [vmem:[%s180] sm:$0xf]
    %v438 = vld [vmem:[%s180 + $0x4] sm:$0xf]
    %v439 = vunpack.c.l.bf16 %v437
    %v440 = vunpack.c.l.bf16 %v438
    %v443 = vunpack.c.l.b16 %v433
    %v444 = vunpack.c.l.b16 %v434
    %v445 = vpack.c.b16 %v444, %v443
    %447 = vmatpush.bf16.msra.mxu0 %v406
    %448 = vmatpush.bf16.msra.mxu0 %v405
    %449 = vmatpush.bf16.msra.mxu0 %v404
    %450 = vmatpush.bf16.msra.mxu0 %v403
    %451 = vmatpush.bf16.msra.mxu0 %v402
    %452 = vmatpush.bf16.msra.mxu0 %v401
    %453 = vmatpush.bf16.msra.mxu0 %v400
    %454 = vmatpush.bf16.msra.mxu0 %v399
    %455 = vmatmul.bf16.gmra.mxu0 %v445
    %v456 = vpop.f32.mrf.mxu0
    %v457 = vadd.f32 0.0, %v456
    %v458 = vpop.f32.mrf.mxu0
    %v459 = vadd.f32 0.0, %v458
    %460 = vdwg.mxu0
    %v461 = vadd.f32 %v439, %v457
    %v462 = vadd.f32 %v440, %v459
    %v463 = vtanh.pop %v461
    %v464 = vtanh.pop %v462
    %v465 = vpack.c.bf16 %v463, %v463
    %v466 = vpack.c.bf16 %v464, %v464
    %467 = vst [vmem:[%s180] sm:$0xf] %v465
    %468 = vst [vmem:[%s180 + $0x4] sm:$0xf] %v466
    %v469 = vld [vmem:[%s210] sm:$0xf]
    %v470 = vld [vmem:[%s210 + $0x4] sm:$0xf]
    %v471 = vunpack.c.l.bf16 %v469
    %v472 = vunpack.c.l.bf16 %v470
    %v475 = vunpack.c.l.b16 %v465
    %v476 = vunpack.c.l.b16 %v466
    %v477 = vpack.c.b16 %v476, %v475
    %479 = vmatpush.bf16.msra.mxu0 %v406
    %480 = vmatpush.bf16.msra.mxu0 %v405
    %481 = vmatpush.bf16.msra.mxu0 %v404
    %482 = vmatpush.bf16.msra.mxu0 %v403
    %483 = vmatpush.bf16.msra.mxu0 %v402
    %484 = vmatpush.bf16.msra.mxu0 %v401
    %485 = vmatpush.bf16.msra.mxu0 %v400
    %486 = vmatpush.bf16.msra.mxu0 %v399
    %487 = vmatmul.bf16.gmra.mxu0 %v477
    %v488 = vpop.f32.mrf.mxu0
    %v489 = vadd.f32 0.0, %v488
    %v490 = vpop.f32.mrf.mxu0
    %v491 = vadd.f32 0.0, %v490
    %492 = vdwg.mxu0
    %v493 = vadd.f32 %v471, %v489
    %v494 = vadd.f32 %v472, %v491
    %v495 = vtanh.pop %v493
    %v496 = vtanh.pop %v494
    %v497 = vpack.c.bf16 %v495, %v495
    %v498 = vpack.c.bf16 %v496, %v496
    %499 = vst [vmem:[%s210] sm:$0xf] %v497
    %500 = vst [vmem:[%s210 + $0x4] sm:$0xf] %v498
    %v501 = vld [vmem:[%s240] sm:$0xf]
    %v502 = vld [vmem:[%s240 + $0x4] sm:$0xf]
    %v503 = vunpack.c.l.bf16 %v501
    %v504 = vunpack.c.l.bf16 %v502
    %v507 = vunpack.c.l.b16 %v497
    %v508 = vunpack.c.l.b16 %v498
    %v509 = vpack.c.b16 %v508, %v507
    %511 = vmatpush.bf16.msra.mxu0 %v406
    %512 = vmatpush.bf16.msra.mxu0 %v405
    %513 = vmatpush.bf16.msra.mxu0 %v404
    %514 = vmatpush.bf16.msra.mxu0 %v403
    %515 = vmatpush.bf16.msra.mxu0 %v402
    %516 = vmatpush.bf16.msra.mxu0 %v401
    %517 = vmatpush.bf16.msra.mxu0 %v400
    %518 = vmatpush.bf16.msra.mxu0 %v399
    %519 = vmatmul.bf16.gmra.mxu0 %v509
    %v520 = vpop.f32.mrf.mxu0
    %v521 = vadd.f32 0.0, %v520
    %v522 = vpop.f32.mrf.mxu0
    %v523 = vadd.f32 0.0, %v522
    %524 = vdwg.mxu0
    %v525 = vadd.f32 %v503, %v521
    %v526 = vadd.f32 %v504, %v523
    %v527 = vtanh.pop %v525
    %v528 = vtanh.pop %v526
    %v529 = vpack.c.bf16 %v527, %v527
    %v530 = vpack.c.bf16 %v528, %v528
    %531 = vst [vmem:[%s240] sm:$0xf] %v529
    %532 = vst [vmem:[%s240 + $0x4] sm:$0xf] %v530
    %v533 = vld [vmem:[%s270] sm:$0xf]
    %v534 = vld [vmem:[%s270 + $0x4] sm:$0xf]
    %v535 = vunpack.c.l.bf16 %v533
    %v536 = vunpack.c.l.bf16 %v534
    %v539 = vunpack.c.l.b16 %v529
    %v540 = vunpack.c.l.b16 %v530
    %v541 = vpack.c.b16 %v540, %v539
    %543 = vmatpush.bf16.msra.mxu0 %v406
    %544 = vmatpush.bf16.msra.mxu0 %v405
    %545 = vmatpush.bf16.msra.mxu0 %v404
    %546 = vmatpush.bf16.msra.mxu0 %v403
    %547 = vmatpush.bf16.msra.mxu0 %v402
    %548 = vmatpush.bf16.msra.mxu0 %v401
    %549 = vmatpush.bf16.msra.mxu0 %v400
    %550 = vmatpush.bf16.msra.mxu0 %v399
    %551 = vmatmul.bf16.gmra.mxu0 %v541
    %v552 = vpop.f32.mrf.mxu0
    %v553 = vadd.f32 0.0, %v552
    %v554 = vpop.f32.mrf.mxu0
    %v555 = vadd.f32 0.0, %v554
    %556 = vdwg.mxu0
    %v557 = vadd.f32 %v535, %v553
    %v558 = vadd.f32 %v536, %v555
    %v559 = vtanh.pop %v557
    %v560 = vtanh.pop %v558
    %v561 = vpack.c.bf16 %v559, %v559
    %v562 = vpack.c.bf16 %v560, %v560
    %563 = vst [vmem:[%s270] sm:$0xf] %v561
    %564 = vst [vmem:[%s270 + $0x4] sm:$0xf] %v562
    %v565 = vld [vmem:[%s300] sm:$0xf]
    %v566 = vld [vmem:[%s300 + $0x4] sm:$0xf]
    %v567 = vunpack.c.l.bf16 %v565
    %v568 = vunpack.c.l.bf16 %v566
    %v571 = vunpack.c.l.b16 %v561
    %v572 = vunpack.c.l.b16 %v562
    %v573 = vpack.c.b16 %v572, %v571
    %575 = vmatpush.bf16.msra.mxu0 %v406
    %576 = vmatpush.bf16.msra.mxu0 %v405
    %577 = vmatpush.bf16.msra.mxu0 %v404
    %578 = vmatpush.bf16.msra.mxu0 %v403
    %579 = vmatpush.bf16.msra.mxu0 %v402
    %580 = vmatpush.bf16.msra.mxu0 %v401
    %581 = vmatpush.bf16.msra.mxu0 %v400
    %582 = vmatpush.bf16.msra.mxu0 %v399
    %583 = vmatmul.bf16.gmra.mxu0 %v573
    %v584 = vpop.f32.mrf.mxu0
    %v585 = vadd.f32 0.0, %v584
    %v586 = vpop.f32.mrf.mxu0
    %v587 = vadd.f32 0.0, %v586
    %588 = vdwg.mxu0
    %v589 = vadd.f32 %v567, %v585
    %v590 = vadd.f32 %v568, %v587
    %v591 = vtanh.pop %v589
    %v592 = vtanh.pop %v590
    %v593 = vpack.c.bf16 %v591, %v591
    %v594 = vpack.c.bf16 %v592, %v592
    %595 = vst [vmem:[%s300] sm:$0xf] %v593
    %596 = vst [vmem:[%s300 + $0x4] sm:$0xf] %v594
    %v597 = vld [vmem:[%s330] sm:$0xf]
    %v598 = vld [vmem:[%s330 + $0x4] sm:$0xf]
    %v599 = vunpack.c.l.bf16 %v597
    %v600 = vunpack.c.l.bf16 %v598
    %v603 = vunpack.c.l.b16 %v593
    %v604 = vunpack.c.l.b16 %v594
    %v605 = vpack.c.b16 %v604, %v603
    %607 = vmatpush.bf16.msra.mxu0 %v406
    %608 = vmatpush.bf16.msra.mxu0 %v405
    %609 = vmatpush.bf16.msra.mxu0 %v404
    %610 = vmatpush.bf16.msra.mxu0 %v403
    %611 = vmatpush.bf16.msra.mxu0 %v402
    %612 = vmatpush.bf16.msra.mxu0 %v401
    %613 = vmatpush.bf16.msra.mxu0 %v400
    %614 = vmatpush.bf16.msra.mxu0 %v399
    %615 = vmatmul.bf16.gmra.mxu0 %v605
    %v616 = vpop.f32.mrf.mxu0
    %v617 = vadd.f32 0.0, %v616
    %v618 = vpop.f32.mrf.mxu0
    %v619 = vadd.f32 0.0, %v618
    %620 = vdwg.mxu0
    %v621 = vadd.f32 %v599, %v617
    %v622 = vadd.f32 %v600, %v619
    %v623 = vtanh.pop %v621
    %v624 = vtanh.pop %v622
    %v625 = vpack.c.bf16 %v623, %v623
    %v626 = vpack.c.bf16 %v624, %v624
    %627 = vst [vmem:[%s330] sm:$0xf] %v625
    %628 = vst [vmem:[%s330 + $0x4] sm:$0xf] %v626
    %v629 = vld [vmem:[%s360] sm:$0xf]
    %v630 = vld [vmem:[%s360 + $0x4] sm:$0xf]
    %v631 = vunpack.c.l.bf16 %v629
    %v632 = vunpack.c.l.bf16 %v630
    %v635 = vunpack.c.l.b16 %v625
    %v636 = vunpack.c.l.b16 %v626
    %v637 = vpack.c.b16 %v636, %v635
    %639 = vmatpush.bf16.msra.mxu0 %v406
    %640 = vmatpush.bf16.msra.mxu0 %v405
    %641 = vmatpush.bf16.msra.mxu0 %v404
    %642 = vmatpush.bf16.msra.mxu0 %v403
    %643 = vmatpush.bf16.msra.mxu0 %v402
    %644 = vmatpush.bf16.msra.mxu0 %v401
    %645 = vmatpush.bf16.msra.mxu0 %v400
    %646 = vmatpush.bf16.msra.mxu0 %v399
    %647 = vmatmul.bf16.gmra.mxu0 %v637
    %v648 = vpop.f32.mrf.mxu0
    %v649 = vadd.f32 0.0, %v648
    %v650 = vpop.f32.mrf.mxu0
    %v651 = vadd.f32 0.0, %v650
    %652 = vdwg.mxu0
    %v653 = vadd.f32 %v631, %v649
    %v654 = vadd.f32 %v632, %v651
    %v655 = vtanh.pop %v653
    %v656 = vtanh.pop %v654
    %v657 = vpack.c.bf16 %v655, %v655
    %v658 = vpack.c.bf16 %v656, %v656
    %659 = vst [vmem:[%s360] sm:$0xf] %v657
    %660 = vst [vmem:[%s360 + $0x4] sm:$0xf] %v658
    %v661 = vld [vmem:[#allocation2] sm:$0xf]
    %v662 = vld [vmem:[#allocation2 + $0x4] sm:$0xf]
    %v663 = vunpack.c.l.bf16 %v661
    %v664 = vunpack.c.l.bf16 %v662
    %v665 = vmul.f32 %v663, %v655
    %v666 = vmul.f32 %v664, %v656
    %667 = vadd.xlane.f32.xlu0 %v665
    %v668 = vpop.xlane.xlu0 %667
    %669 = vadd.xlane.f32.xlu0 %v666
    %v670 = vpop.xlane.xlu0 %669
    %v671 = vsub.f32 -inf, %v668
    %v672 = vsub.f32 -inf, %v670
    %v673 = vmul.f32 %v671, 1.442695
    %v674 = vpow.pop %v673
    %v675 = vmul.f32 %v672, 1.442695
    %v676 = vpow.pop %v675
    %v677 = vsub.f32 %v668, %v668
    %v678 = vsub.f32 %v670, %v670
    %v679 = vmul.f32 %v677, 1.442695
    %v680 = vpow.pop %v679
    %v681 = vmul.f32 %v678, 1.442695
    %v682 = vpow.pop %v681
    %v683 = vmul.f32 %v674, 0.0
    %v684 = vmul.f32 %v676, 0.0
    %v685 = vadd.f32 %v683, %v680
    %v686 = vadd.f32 %v684, %v682
    %v687 = vmul.f32 %v680, %v663
    %v688 = vmul.f32 %v682, %v664
    %v689 = vadd.f32 %v683, %v687
    %v690 = vadd.f32 %v684, %v688
    %v691 = vld [vmem:[%s180] sm:$0xf]
    %v692 = vld [vmem:[%s180 + $0x4] sm:$0xf]
    %v693 = vunpack.c.l.bf16 %v691
    %v694 = vunpack.c.l.bf16 %v692
    %v695 = vmul.f32 %v693, %v655
    %v696 = vmul.f32 %v694, %v656
    %697 = vadd.xlane.f32.xlu0 %v695
    %v698 = vpop.xlane.xlu0 %697
    %699 = vadd.xlane.f32.xlu0 %v696
    %v700 = vpop.xlane.xlu0 %699
    %v701 = vmax.f32 %v668, %v698
    %v702 = vmax.f32 %v670, %v700
    %v703 = vsub.f32 %v668, %v701
    %v704 = vsub.f32 %v670, %v702
    %v705 = vmul.f32 %v703, 1.442695
    %v706 = vpow.pop %v705
    %v707 = vmul.f32 %v704, 1.442695
    %v708 = vpow.pop %v707
    %v709 = vsub.f32 %v698, %v701
    %v710 = vsub.f32 %v700, %v702
    %v711 = vmul.f32 %v709, 1.442695
    %v712 = vpow.pop %v711
    %v713 = vmul.f32 %v710, 1.442695
    %v714 = vpow.pop %v713
    %v715 = vmul.f32 %v706, %v685
    %v716 = vmul.f32 %v708, %v686
    %v717 = vadd.f32 %v715, %v712
    %v718 = vadd.f32 %v716, %v714
    %v719 = vmul.f32 %v706, %v689
    %v720 = vmul.f32 %v708, %v690
    %v721 = vmul.f32 %v712, %v693
    %v722 = vmul.f32 %v714, %v694
    %v723 = vadd.f32 %v719, %v721
    %v724 = vadd.f32 %v720, %v722
    %v725 = vld [vmem:[%s210] sm:$0xf]
    %v726 = vld [vmem:[%s210 + $0x4] sm:$0xf]
    %v727 = vunpack.c.l.bf16 %v725
    %v728 = vunpack.c.l.bf16 %v726
    %v729 = vmul.f32 %v727, %v655
    %v730 = vmul.f32 %v728, %v656
    %731 = vadd.xlane.f32.xlu0 %v729
    %v732 = vpop.xlane.xlu0 %731
    %733 = vadd.xlane.f32.xlu0 %v730
    %v734 = vpop.xlane.xlu0 %733
    %v735 = vmax.f32 %v701, %v732
    %v736 = vmax.f32 %v702, %v734
    %v737 = vsub.f32 %v701, %v735
    %v738 = vsub.f32 %v702, %v736
    %v739 = vmul.f32 %v737, 1.442695
    %v740 = vpow.pop %v739
    %v741 = vmul.f32 %v738, 1.442695
    %v742 = vpow.pop %v741
    %v743 = vsub.f32 %v732, %v735
    %v744 = vsub.f32 %v734, %v736
    %v745 = vmul.f32 %v743, 1.442695
    %v746 = vpow.pop %v745
    %v747 = vmul.f32 %v744, 1.442695
    %v748 = vpow.pop %v747
    %v749 = vmul.f32 %v740, %v717
    %v750 = vmul.f32 %v742, %v718
    %v751 = vadd.f32 %v749, %v746
    %v752 = vadd.f32 %v750, %v748
    %v753 = vmul.f32 %v740, %v723
    %v754 = vmul.f32 %v742, %v724
    %v755 = vmul.f32 %v746, %v727
    %v756 = vmul.f32 %v748, %v728
    %v757 = vadd.f32 %v753, %v755
    %v758 = vadd.f32 %v754, %v756
    %v759 = vld [vmem:[%s240] sm:$0xf]
    %v760 = vld [vmem:[%s240 + $0x4] sm:$0xf]
    %v761 = vunpack.c.l.bf16 %v759
    %v762 = vunpack.c.l.bf16 %v760
    %v763 = vmul.f32 %v761, %v655
    %v764 = vmul.f32 %v762, %v656
    %765 = vadd.xlane.f32.xlu0 %v763
    %v766 = vpop.xlane.xlu0 %765
    %767 = vadd.xlane.f32.xlu0 %v764
    %v768 = vpop.xlane.xlu0 %767
    %v769 = vmax.f32 %v735, %v766
    %v770 = vmax.f32 %v736, %v768
    %v771 = vsub.f32 %v735, %v769
    %v772 = vsub.f32 %v736, %v770
    %v773 = vmul.f32 %v771, 1.442695
    %v774 = vpow.pop %v773
    %v775 = vmul.f32 %v772, 1.442695
    %v776 = vpow.pop %v775
    %v777 = vsub.f32 %v766, %v769
    %v778 = vsub.f32 %v768, %v770
    %v779 = vmul.f32 %v777, 1.442695
    %v780 = vpow.pop %v779
    %v781 = vmul.f32 %v778, 1.442695
    %v782 = vpow.pop %v781
    %v783 = vmul.f32 %v774, %v751
    %v784 = vmul.f32 %v776, %v752
    %v785 = vadd.f32 %v783, %v780
    %v786 = vadd.f32 %v784, %v782
    %v787 = vmul.f32 %v774, %v757
    %v788 = vmul.f32 %v776, %v758
    %v789 = vmul.f32 %v780, %v761
    %v790 = vmul.f32 %v782, %v762
    %v791 = vadd.f32 %v787, %v789
    %v792 = vadd.f32 %v788, %v790
    %v793 = vld [vmem:[%s270] sm:$0xf]
    %v794 = vld [vmem:[%s270 + $0x4] sm:$0xf]
    %v795 = vunpack.c.l.bf16 %v793
    %v796 = vunpack.c.l.bf16 %v794
    %v797 = vmul.f32 %v795, %v655
    %v798 = vmul.f32 %v796, %v656
    %799 = vadd.xlane.f32.xlu0 %v797
    %v800 = vpop.xlane.xlu0 %799
    %801 = vadd.xlane.f32.xlu0 %v798
    %v802 = vpop.xlane.xlu0 %801
    %v803 = vmax.f32 %v769, %v800
    %v804 = vmax.f32 %v770, %v802
    %v805 = vsub.f32 %v769, %v803
    %v806 = vsub.f32 %v770, %v804
    %v807 = vmul.f32 %v805, 1.442695
    %v808 = vpow.pop %v807
    %v809 = vmul.f32 %v806, 1.442695
    %v810 = vpow.pop %v809
    %v811 = vsub.f32 %v800, %v803
    %v812 = vsub.f32 %v802, %v804
    %v813 = vmul.f32 %v811, 1.442695
    %v814 = vpow.pop %v813
    %v815 = vmul.f32 %v812, 1.442695
    %v816 = vpow.pop %v815
    %v817 = vmul.f32 %v808, %v785
    %v818 = vmul.f32 %v810, %v786
    %v819 = vadd.f32 %v817, %v814
    %v820 = vadd.f32 %v818, %v816
    %v821 = vmul.f32 %v808, %v791
    %v822 = vmul.f32 %v810, %v792
    %v823 = vmul.f32 %v814, %v795
    %v824 = vmul.f32 %v816, %v796
    %v825 = vadd.f32 %v821, %v823
    %v826 = vadd.f32 %v822, %v824
    %v827 = vld [vmem:[%s300] sm:$0xf]
    %v828 = vld [vmem:[%s300 + $0x4] sm:$0xf]
    %v829 = vunpack.c.l.bf16 %v827
    %v830 = vunpack.c.l.bf16 %v828
    %v831 = vmul.f32 %v829, %v655
    %v832 = vmul.f32 %v830, %v656
    %833 = vadd.xlane.f32.xlu0 %v831
    %v834 = vpop.xlane.xlu0 %833
    %835 = vadd.xlane.f32.xlu0 %v832
    %v836 = vpop.xlane.xlu0 %835
    %v837 = vmax.f32 %v803, %v834
    %v838 = vmax.f32 %v804, %v836
    %v839 = vsub.f32 %v803, %v837
    %v840 = vsub.f32 %v804, %v838
    %v841 = vmul.f32 %v839, 1.442695
    %v842 = vpow.pop %v841
    %v843 = vmul.f32 %v840, 1.442695
    %v844 = vpow.pop %v843
    %v845 = vsub.f32 %v834, %v837
    %v846 = vsub.f32 %v836, %v838
    %v847 = vmul.f32 %v845, 1.442695
    %v848 = vpow.pop %v847
    %v849 = vmul.f32 %v846, 1.442695
    %v850 = vpow.pop %v849
    %v851 = vmul.f32 %v842, %v819
    %v852 = vmul.f32 %v844, %v820
    %v853 = vadd.f32 %v851, %v848
    %v854 = vadd.f32 %v852, %v850
    %v855 = vmul.f32 %v842, %v825
    %v856 = vmul.f32 %v844, %v826
    %v857 = vmul.f32 %v848, %v829
    %v858 = vmul.f32 %v850, %v830
    %v859 = vadd.f32 %v855, %v857
    %v860 = vadd.f32 %v856, %v858
    %v861 = vld [vmem:[%s330] sm:$0xf]
    %v862 = vld [vmem:[%s330 + $0x4] sm:$0xf]
    %v863 = vunpack.c.l.bf16 %v861
    %v864 = vunpack.c.l.bf16 %v862
    %v865 = vmul.f32 %v863, %v655
    %v866 = vmul.f32 %v864, %v656
    %867 = vadd.xlane.f32.xlu0 %v865
    %v868 = vpop.xlane.xlu0 %867
    %869 = vadd.xlane.f32.xlu0 %v866
    %v870 = vpop.xlane.xlu0 %869
    %v871 = vmax.f32 %v837, %v868
    %v872 = vmax.f32 %v838, %v870
    %v873 = vsub.f32 %v837, %v871
    %v874 = vsub.f32 %v838, %v872
    %v875 = vmul.f32 %v873, 1.442695
    %v876 = vpow.pop %v875
    %v877 = vmul.f32 %v874, 1.442695
    %v878 = vpow.pop %v877
    %v879 = vsub.f32 %v868, %v871
    %v880 = vsub.f32 %v870, %v872
    %v881 = vmul.f32 %v879, 1.442695
    %v882 = vpow.pop %v881
    %v883 = vmul.f32 %v880, 1.442695
    %v884 = vpow.pop %v883
    %v885 = vmul.f32 %v876, %v853
    %v886 = vmul.f32 %v878, %v854
    %v887 = vadd.f32 %v885, %v882
    %v888 = vadd.f32 %v886, %v884
    %v889 = vmul.f32 %v876, %v859
    %v890 = vmul.f32 %v878, %v860
    %v891 = vmul.f32 %v882, %v863
    %v892 = vmul.f32 %v884, %v864
    %v893 = vadd.f32 %v889, %v891
    %v894 = vadd.f32 %v890, %v892
    %v895 = vld [vmem:[%s360] sm:$0xf]
    %v896 = vld [vmem:[%s360 + $0x4] sm:$0xf]
    %v897 = vunpack.c.l.bf16 %v895
    %v898 = vunpack.c.l.bf16 %v896
    %v899 = vmul.f32 %v897, %v655
    %v900 = vmul.f32 %v898, %v656
    %901 = vadd.xlane.f32.xlu0 %v899
    %v902 = vpop.xlane.xlu0 %901
    %903 = vadd.xlane.f32.xlu0 %v900
    %v904 = vpop.xlane.xlu0 %903
    %v905 = vmax.f32 %v871, %v902
    %v906 = vmax.f32 %v872, %v904
    %v907 = vsub.f32 %v871, %v905
    %v908 = vsub.f32 %v872, %v906
    %v909 = vmul.f32 %v907, 1.442695
    %v910 = vpow.pop %v909
    %v911 = vmul.f32 %v908, 1.442695
    %v912 = vpow.pop %v911
    %v913 = vsub.f32 %v902, %v905
    %v914 = vsub.f32 %v904, %v906
    %v915 = vmul.f32 %v913, 1.442695
    %v916 = vpow.pop %v915
    %v917 = vmul.f32 %v914, 1.442695
    %v918 = vpow.pop %v917
    %v919 = vmul.f32 %v910, %v887
    %v920 = vmul.f32 %v912, %v888
    %v921 = vadd.f32 %v919, %v916
    %v922 = vadd.f32 %v920, %v918
    %v923 = vmul.f32 %v910, %v893
    %v924 = vmul.f32 %v912, %v894
    %v925 = vmul.f32 %v916, %v897
    %v926 = vmul.f32 %v918, %v898
    %v927 = vadd.f32 %v923, %v925
    %v928 = vadd.f32 %v924, %v926
    %v929 = vrcp.pop %v921
    %v930 = vrcp.pop %v922
    %v931 = vmul.f32 %v927, %v929
    %v932 = vmul.f32 %v928, %v930
    %v933 = vpack.c.bf16 %v932, %v931
    %v934 = vld [vmem:[#allocation9] sm:$0xf]
    %v935 = vld [vmem:[#allocation9 + $0x4] sm:$0xf]
    %v936 = vld [vmem:[#allocation9 + $0x8] sm:$0xf]
    %v937 = vld [vmem:[#allocation9 + $0xc] sm:$0xf]
    %v938 = vld [vmem:[#allocation9 + $0x10] sm:$0xf]
    %v939 = vld [vmem:[#allocation9 + $0x14] sm:$0xf]
    %v940 = vld [vmem:[#allocation9 + $0x18] sm:$0xf]
    %v941 = vld [vmem:[#allocation9 + $0x1c] sm:$0xf]
    %v942 = vld [vmem:[#allocation9 + $0x20] sm:$0xf]
    %v943 = vld [vmem:[#allocation9 + $0x24] sm:$0xf]
    %v944 = vld [vmem:[#allocation9 + $0x28] sm:$0xf]
    %v945 = vld [vmem:[#allocation9 + $0x2c] sm:$0xf]
    %v946 = vld [vmem:[#allocation9 + $0x30] sm:$0xf]
    %v947 = vld [vmem:[#allocation9 + $0x34] sm:$0xf]
    %v948 = vld [vmem:[#allocation9 + $0x38] sm:$0xf]
    %v949 = vld [vmem:[#allocation9 + $0x3c] sm:$0xf]
    %v950 = vld [vmem:[%s5] sm:$0x1]
    %v952 = vperm.slane %v950, 0
    %v970 = vunpack.c.l.b16 %v934
    %v971 = vunpack.c.l.b16 %v935
    %v972 = vunpack.c.l.b16 %v936
    %v973 = vunpack.c.l.b16 %v937
    %v974 = vunpack.c.l.b16 %v938
    %v975 = vunpack.c.l.b16 %v939
    %v976 = vunpack.c.l.b16 %v940
    %v977 = vunpack.c.l.b16 %v941
    %v978 = vunpack.c.l.b16 %v942
    %v979 = vunpack.c.l.b16 %v943
    %v980 = vunpack.c.l.b16 %v944
    %v981 = vunpack.c.l.b16 %v945
    %v982 = vunpack.c.l.b16 %v946
    %v983 = vunpack.c.l.b16 %v947
    %v984 = vunpack.c.l.b16 %v948
    %v985 = vunpack.c.l.b16 %v949
    %v986 = vpack.c.b16 %v971, %v970
    %v987 = vpack.c.b16 %v973, %v972
    %v988 = vpack.c.b16 %v975, %v974
    %v989 = vpack.c.b16 %v977, %v976
    %v990 = vpack.c.b16 %v979, %v978
    %v991 = vpack.c.b16 %v981, %v980
    %v992 = vpack.c.b16 %v983, %v982
    %v993 = vpack.c.b16 %v985, %v984
    %1002 = vmatpush.bf16.msra.mxu0 %v993
    %1003 = vmatpush.bf16.msra.mxu0 %v992
    %1004 = vmatpush.bf16.msra.mxu0 %v991
    %1005 = vmatpush.bf16.msra.mxu0 %v990
    %1006 = vmatpush.bf16.msra.mxu0 %v989
    %1007 = vmatpush.bf16.msra.mxu0 %v988
    %1008 = vmatpush.bf16.msra.mxu0 %v987
    %1009 = vmatpush.bf16.msra.mxu0 %v986
    %1010 = vmatmul.bf16.gmra.mxu0 %v933
    %v1011 = vpop.f32.mrf.mxu0
    %v1012 = vadd.f32 %v952, %v1011
    %v1013 = vpop.f32.mrf.mxu0
    %v1014 = vadd.f32 %v952, %v1013
    %1015 = vdwg.mxu0
    %1016 = vst [vmem:[#allocation11] sm:$0xff] %v1012
    %1017 = vst [vmem:[#allocation11 + $0x8] sm:$0xff] %v1014
    // Predicated region
    $region42: #{tpu_custom_call.1} parent=1 // pred_check
      _
    $region43: #{tpu_custom_call.1} parent=1 // pred_check_branch
      %1019 = sbr.rel (0) target = $region45
    $region44: #{tpu_custom_call.1} parent=1 // pred_region
      %1021 = vsyncadd [#allocation5], 0
      %s1022 = sshll.u32 [#allocation11], 4
      %s1023 = int_to_ptr.vmem [resolvable:$true] %s1022
      %s1024 = sshll.u32 %s6, 4
      %s1025 = int_to_ptr.hbm [resolvable:$true] %s1024
      %1030 = dma.vmem_to_hbm [thread:$0]  %s1023, 256, %s1025, [#allocation5], 128, 128, 8
    $region45: #{tpu_custom_call.1} parent=1 // pred_fallthru
      _
    // Predicated region
    $region46: #{tpu_custom_call.1} parent=1 // pred_check
      _
    $region47: #{tpu_custom_call.1} parent=1 // pred_check_branch
      %1032 = sbr.rel (0) target = $region49
    $region48: #{tpu_custom_call.1} parent=1 // pred_region
      %1034 = dma.done [#allocation5], 256
    $region49: #{tpu_custom_call.1} parent=1 // pred_fallthru
      _
    %1035 = vsyncpa [#allocation4], 1
    %1036 = vsyncpa [#allocation7], 1
    %1037 = vsyncpa [#allocation10], 1
    %1038 = vsyncpa [#allocation5], 1

</llo_original>
